<compile_context>
chip_gen: v6e
topology: v6e:2x2x1
jax: 0.10.0
libtpu: 0.0.40
codegen_flags: <defaults>
</compile_context>

<pallas_src>
import functools

import jax
import jax.numpy as jnp
from jax.experimental import pallas as pl
from jax.experimental.pallas import tpu as pltpu


# Architecture constants fixed by the nn.Module definition.
_IC1 = 4    # channels after Unflatten
_MID = 16   # channels after first ConvTranspose2d


# ---------------------------------------------------------------------------
# Fused decoder kernel (one grid step == one batch element)
# ---------------------------------------------------------------------------
def _decoder_kernel(x_ref, w1_ref, b1_ref, w2_ref, b2_ref, w3_ref, b3_ref,
                    o_ref, *, P, C):
    # ---- Stage 1: Linear(latent -> 4*P) + ReLU ----------------------------
    x = x_ref[0]                                                 # (1, latent)
    h = jnp.dot(x, w1_ref[...], preferred_element_type=jnp.float32)
    h = jnp.maximum(h + b1_ref[...], 0.0)                        # (1, 4*P), channel-major

    # ---- Stage 2: ConvTranspose2d(4, 16, 2, stride=2) + ReLU --------------
    # y[(k1, oc), p] = relu(sum_ic wt1[ic, oc, k1i, k1j] * h[ic, p] + bc1[oc])
    # Tiny K (=4): VPU broadcast FMAs on a (64, P) tile, MXU not used.
    w2 = w2_ref[...]                                             # (4*_MID, _IC1)
    acc = jnp.zeros((4 * _MID, P), jnp.float32) + b2_ref[...]    # (64, P)
    for ic in range(_IC1):
        h_ic = h[:, ic * P:(ic + 1) * P]                         # (1, P) pixel row
        acc = acc + w2[:, ic:ic + 1] * h_ic                      # (64,1)*(1,P)
    y = jnp.maximum(acc, 0.0)                                    # (64, P)

    # ---- Stage 3: ConvTranspose2d(16, C, 2, stride=2) + Sigmoid -----------
    # z[(k1, c, k2), p] = sigmoid(sum_oc y[(k1, oc), p] * wt2[oc, c, k2] + bc2[c])
    # Tiny K (=16): VPU broadcast FMAs per k1 group on (C*4, P) tiles.
    w3 = w3_ref[...]                                             # (C*4, _MID)
    b3 = b3_ref[...]                                             # (C*4, 1)
    groups = []
    for k1 in range(4):
        yk = y[k1 * _MID:(k1 + 1) * _MID, :]                     # (16, P)
        z = jnp.zeros((C * 4, P), jnp.float32) + b3
        for oc in range(_MID):
            z = z + w3[:, oc:oc + 1] * yk[oc:oc + 1, :]          # (C*4,1)*(1,P)
        groups.append(jax.nn.sigmoid(z))
    o_ref[0] = jnp.concatenate(groups, axis=0)                   # (4*C*4, P)


# ---------------------------------------------------------------------------
# Parameter construction (deterministic, mirrors nn.Module __init__ shapes)
# ---------------------------------------------------------------------------
def init_params(key, input_shape, latent_dim):
    C, H, W = input_shape
    lin_out = 4 * (H * W) // 16
    k1, k2, k3, k4, k5, k6 = jax.random.split(key, 6)
    scale = 0.1
    return {
        "w1": scale * jax.random.normal(k1, (latent_dim, lin_out), jnp.float32),
        "b1": scale * jax.random.normal(k2, (lin_out,), jnp.float32),
        "wt1": scale * jax.random.normal(k3, (_IC1, _MID, 2, 2), jnp.float32),
        "bc1": scale * jax.random.normal(k4, (_MID,), jnp.float32),
        "wt2": scale * jax.random.normal(k5, (_MID, C, 2, 2), jnp.float32),
        "bc2": scale * jax.random.normal(k6, (C,), jnp.float32),
    }


def pack_params(p, input_shape):
    """One-time re-packing of weights into the kernel's layouts."""
    C, H, W = input_shape
    P = (H // 4) * (W // 4)
    # Stage 2: rows = (k1i, k1j, oc), cols = ic
    w2t = jnp.transpose(p["wt1"], (2, 3, 1, 0)).reshape(4 * _MID, _IC1)
    b2c = jnp.tile(p["bc1"], 4).reshape(4 * _MID, 1)
    # Stage 3: rows = (c, k2i, k2j), cols = oc
    w3t = jnp.transpose(p["wt2"].reshape(_MID, C * 4))
    b3c = jnp.repeat(p["bc2"], 4).reshape(C * 4, 1)
    return {
        "w1": p["w1"],                        # (latent, 4*P), channel-major cols
        "b1": p["b1"].reshape(1, 4 * P),
        "w2t": w2t, "b2c": b2c,
        "w3t": w3t, "b3c": b3c,
    }


# ---------------------------------------------------------------------------
# Forward pass: single fused pallas_call + one boundary depth-to-space
# ---------------------------------------------------------------------------
def cnn_decoder_forward(x, packed, input_shape):
    C, H, W = input_shape
    assert H % 4 == 0 and W % 4 == 0
    B, latent = x.shape
    Hs, Ws = H // 4, W // 4
    P = Hs * Ws

    kernel = functools.partial(_decoder_kernel, P=P, C=C)
    z = pl.pallas_call(
        kernel,
        out_shape=jax.ShapeDtypeStruct((B, 4 * C * 4, P), jnp.float32),
        grid=(B,),
        in_specs=[
            pl.BlockSpec((1, 1, latent), lambda b: (b, 0, 0)),    # x
            pl.BlockSpec((latent, 4 * P), lambda b: (0, 0)),      # w1 (resident)
            pl.BlockSpec((1, 4 * P), lambda b: (0, 0)),           # b1
            pl.BlockSpec((4 * _MID, _IC1), lambda b: (0, 0)),     # w2t
            pl.BlockSpec((4 * _MID, 1), lambda b: (0, 0)),        # b2c
            pl.BlockSpec((C * 4, _MID), lambda b: (0, 0)),        # w3t
            pl.BlockSpec((C * 4, 1), lambda b: (0, 0)),           # b3c
        ],
        out_specs=pl.BlockSpec((1, 4 * C * 4, P), lambda b: (b, 0, 0)),
        compiler_params=pltpu.CompilerParams(
            dimension_semantics=("parallel",)),
    )(x.reshape(B, 1, latent), packed["w1"], packed["b1"],
      packed["w2t"], packed["b2c"], packed["w3t"], packed["b3c"])

    # z rows = (k1i, k1j, c, k2i, k2j), lanes = base pixel (i, j).
    # Single depth-to-space conversion at the output boundary -> NCHW.
    out = (z.reshape(B, 2, 2, C, 2, 2, Hs, Ws)
            .transpose(0, 3, 6, 1, 4, 7, 2, 5)
            .reshape(B, C, H, W))
    return out


# ---------------------------------------------------------------------------
# Pure-JAX reference (mirrors PyTorch semantics) for the correctness check
# ---------------------------------------------------------------------------
def reference_forward(x, p, input_shape):
    C, H, W = input_shape
    B = x.shape[0]
    h = jnp.maximum(x @ p["w1"] + p["b1"], 0.0)
    h = h.reshape(B, _IC1, H // 4, W // 4)
    y = jnp.einsum("bihw,iokl->bohkwl", h, p["wt1"])
    y = y + p["bc1"][None, :, None, None, None, None]
    y = jnp.maximum(y.reshape(B, _MID, H // 2, W // 2), 0.0)
    z = jnp.einsum("bihw,iokl->bohkwl", y, p["wt2"])
    z = z + p["bc2"][None, :, None, None, None, None]
    return jax.nn.sigmoid(z.reshape(B, C, H, W))


if __name__ == "__main__":
    input_shape = (3, 16, 16)   # (C, H, W) as in PyTorch
    latent_dim = 32
    batch = 2

    key = jax.random.PRNGKey(0)
    kx, kp = jax.random.split(key)
    x = jax.random.normal(kx, (batch, latent_dim), jnp.float32)
    raw = init_params(kp, input_shape, latent_dim)
    packed = pack_params(raw, input_shape)

    fwd = jax.jit(lambda a: cnn_decoder_forward(a, packed, input_shape))
    out = jax.block_until_ready(fwd(x))

    ref = reference_forward(x, raw, input_shape)
    assert out.shape == (batch,) + input_shape, out.shape
    assert jnp.allclose(out, ref, atol=1e-5, rtol=1e-5), "mismatch vs reference"

    print("KERNEL_OK")
</pallas_src>

<mosaic_0001>
module attributes {stable_mosaic.version = 11 : i64} {
  func.func @_decoder_kernel(%arg0: i32, %arg1: memref<1x1x32xf32, #tpu.memory_space<vmem>>, %arg2: memref<32x64xf32, #tpu.memory_space<vmem>>, %arg3: memref<1x64xf32, #tpu.memory_space<vmem>>, %arg4: memref<64x4xf32, #tpu.memory_space<vmem>>, %arg5: memref<64x1xf32, #tpu.memory_space<vmem>>, %arg6: memref<12x16xf32, #tpu.memory_space<vmem>>, %arg7: memref<12x1xf32, #tpu.memory_space<vmem>>, %arg8: memref<1x48x16xf32, #tpu.memory_space<vmem>>) attributes {dimension_semantics = [#tpu.dimension_semantics<parallel>], iteration_bounds = array<i64: 2>, scalar_prefetch = 0 : i64, scratch_operands = 0 : i64, tpu.core_type = #tpu.core_type<tc>, window_params = [{transform_indices = @transform_0, window_bounds = array<i64: 1, 1, 32>}, {pipeline_mode = #tpu.pipeline_mode<synchronous>, transform_indices = @transform_1, window_bounds = array<i64: 32, 64>}, {pipeline_mode = #tpu.pipeline_mode<synchronous>, transform_indices = @transform_2, window_bounds = array<i64: 1, 64>}, {pipeline_mode = #tpu.pipeline_mode<synchronous>, transform_indices = @transform_3, window_bounds = array<i64: 64, 4>}, {pipeline_mode = #tpu.pipeline_mode<synchronous>, transform_indices = @transform_4, window_bounds = array<i64: 64, 1>}, {pipeline_mode = #tpu.pipeline_mode<synchronous>, transform_indices = @transform_5, window_bounds = array<i64: 12, 16>}, {pipeline_mode = #tpu.pipeline_mode<synchronous>, transform_indices = @transform_6, window_bounds = array<i64: 12, 1>}, {transform_indices = @transform_7, window_bounds = array<i64: 1, 48, 16>}]} {
    %c0 = arith.constant 0 : index
    %c0_0 = arith.constant 0 : index
    %c0_1 = arith.constant 0 : index
    %0 = vector.load %arg1[%c0, %c0_0, %c0_1] : memref<1x1x32xf32, #tpu.memory_space<vmem>>, vector<1x1x32xf32>
    %1 = vector.shape_cast %0 : vector<1x1x32xf32> to vector<1x32xf32>
    %c0_2 = arith.constant 0 : index
    %c0_3 = arith.constant 0 : index
    %2 = vector.load %arg2[%c0_2, %c0_3] : memref<32x64xf32, #tpu.memory_space<vmem>>, vector<32x64xf32>
    %cst = arith.constant dense<0.000000e+00> : vector<1x64xf32>
    %3 = tpu.matmul %1, %2, %cst {dimension_numbers = #tpu.dot_dimension_numbers<[1], [0], [0], [1], [0, 0, 1, 1], [], []>} : vector<1x32xf32>, vector<32x64xf32>, vector<1x64xf32> -> vector<1x64xf32>
    %c0_4 = arith.constant 0 : index
    %c0_5 = arith.constant 0 : index
    %4 = vector.load %arg3[%c0_4, %c0_5] : memref<1x64xf32, #tpu.memory_space<vmem>>, vector<1x64xf32>
    %5 = arith.addf %3, %4 : vector<1x64xf32>
    %cst_6 = arith.constant 0.000000e+00 : f32
    %6 = vector.broadcast %cst_6 : f32 to vector<1x64xf32>
    %7 = arith.maximumf %5, %6 : vector<1x64xf32>
    %c0_7 = arith.constant 0 : index
    %c0_8 = arith.constant 0 : index
    %8 = vector.load %arg4[%c0_7, %c0_8] : memref<64x4xf32, #tpu.memory_space<vmem>>, vector<64x4xf32>
    %cst_9 = arith.constant 0.000000e+00 : f32
    %9 = vector.broadcast %cst_9 : f32 to vector<64x16xf32>
    %c0_10 = arith.constant 0 : index
    %c0_11 = arith.constant 0 : index
    %10 = vector.load %arg5[%c0_10, %c0_11] : memref<64x1xf32, #tpu.memory_space<vmem>>, vector<64x1xf32>
    %11 = vector.broadcast %10 : vector<64x1xf32> to vector<64x16xf32>
    %12 = arith.addf %9, %11 : vector<64x16xf32>
    %13 = vector.extract_strided_slice %7 {offsets = [0, 0], sizes = [1, 16], strides = [1, 1]} : vector<1x64xf32> to vector<1x16xf32>
    %14 = vector.extract_strided_slice %8 {offsets = [0, 0], sizes = [64, 1], strides = [1, 1]} : vector<64x4xf32> to vector<64x1xf32>
    %15 = vector.broadcast %14 : vector<64x1xf32> to vector<64x16xf32>
    %16 = vector.broadcast %13 : vector<1x16xf32> to vector<64x16xf32>
    %17 = arith.mulf %15, %16 : vector<64x16xf32>
    %18 = arith.addf %12, %17 : vector<64x16xf32>
    %19 = vector.extract_strided_slice %7 {offsets = [0, 16], sizes = [1, 16], strides = [1, 1]} : vector<1x64xf32> to vector<1x16xf32>
    %20 = vector.extract_strided_slice %8 {offsets = [0, 1], sizes = [64, 1], strides = [1, 1]} : vector<64x4xf32> to vector<64x1xf32>
    %21 = vector.broadcast %20 : vector<64x1xf32> to vector<64x16xf32>
    %22 = vector.broadcast %19 : vector<1x16xf32> to vector<64x16xf32>
    %23 = arith.mulf %21, %22 : vector<64x16xf32>
    %24 = arith.addf %18, %23 : vector<64x16xf32>
    %25 = vector.extract_strided_slice %7 {offsets = [0, 32], sizes = [1, 16], strides = [1, 1]} : vector<1x64xf32> to vector<1x16xf32>
    %26 = vector.extract_strided_slice %8 {offsets = [0, 2], sizes = [64, 1], strides = [1, 1]} : vector<64x4xf32> to vector<64x1xf32>
    %27 = vector.broadcast %26 : vector<64x1xf32> to vector<64x16xf32>
    %28 = vector.broadcast %25 : vector<1x16xf32> to vector<64x16xf32>
    %29 = arith.mulf %27, %28 : vector<64x16xf32>
    %30 = arith.addf %24, %29 : vector<64x16xf32>
    %31 = vector.extract_strided_slice %7 {offsets = [0, 48], sizes = [1, 16], strides = [1, 1]} : vector<1x64xf32> to vector<1x16xf32>
    %32 = vector.extract_strided_slice %8 {offsets = [0, 3], sizes = [64, 1], strides = [1, 1]} : vector<64x4xf32> to vector<64x1xf32>
    %33 = vector.broadcast %32 : vector<64x1xf32> to vector<64x16xf32>
    %34 = vector.broadcast %31 : vector<1x16xf32> to vector<64x16xf32>
    %35 = arith.mulf %33, %34 : vector<64x16xf32>
    %36 = arith.addf %30, %35 : vector<64x16xf32>
    %cst_12 = arith.constant 0.000000e+00 : f32
    %37 = vector.broadcast %cst_12 : f32 to vector<64x16xf32>
    %38 = arith.maximumf %36, %37 : vector<64x16xf32>
    %c0_13 = arith.constant 0 : index
    %c0_14 = arith.constant 0 : index
    %39 = vector.load %arg6[%c0_13, %c0_14] : memref<12x16xf32, #tpu.memory_space<vmem>>, vector<12x16xf32>
    %c0_15 = arith.constant 0 : index
    %c0_16 = arith.constant 0 : index
    %40 = vector.load %arg7[%c0_15, %c0_16] : memref<12x1xf32, #tpu.memory_space<vmem>>, vector<12x1xf32>
    %41 = vector.extract_strided_slice %38 {offsets = [0, 0], sizes = [16, 16], strides = [1, 1]} : vector<64x16xf32> to vector<16x16xf32>
    %cst_17 = arith.constant 0.000000e+00 : f32
    %42 = vector.broadcast %cst_17 : f32 to vector<12x16xf32>
    %43 = vector.broadcast %40 : vector<12x1xf32> to vector<12x16xf32>
    %44 = arith.addf %42, %43 : vector<12x16xf32>
    %45 = vector.extract_strided_slice %39 {offsets = [0, 0], sizes = [12, 1], strides = [1, 1]} : vector<12x16xf32> to vector<12x1xf32>
    %46 = vector.extract_strided_slice %41 {offsets = [0, 0], sizes = [1, 16], strides = [1, 1]} : vector<16x16xf32> to vector<1x16xf32>
    %47 = vector.broadcast %45 : vector<12x1xf32> to vector<12x16xf32>
    %48 = vector.broadcast %46 : vector<1x16xf32> to vector<12x16xf32>
    %49 = arith.mulf %47, %48 : vector<12x16xf32>
    %50 = arith.addf %44, %49 : vector<12x16xf32>
    %51 = vector.extract_strided_slice %39 {offsets = [0, 1], sizes = [12, 1], strides = [1, 1]} : vector<12x16xf32> to vector<12x1xf32>
    %52 = vector.extract_strided_slice %41 {offsets = [1, 0], sizes = [1, 16], strides = [1, 1]} : vector<16x16xf32> to vector<1x16xf32>
    %53 = vector.broadcast %51 : vector<12x1xf32> to vector<12x16xf32>
    %54 = vector.broadcast %52 : vector<1x16xf32> to vector<12x16xf32>
    %55 = arith.mulf %53, %54 : vector<12x16xf32>
    %56 = arith.addf %50, %55 : vector<12x16xf32>
    %57 = vector.extract_strided_slice %39 {offsets = [0, 2], sizes = [12, 1], strides = [1, 1]} : vector<12x16xf32> to vector<12x1xf32>
    %58 = vector.extract_strided_slice %41 {offsets = [2, 0], sizes = [1, 16], strides = [1, 1]} : vector<16x16xf32> to vector<1x16xf32>
    %59 = vector.broadcast %57 : vector<12x1xf32> to vector<12x16xf32>
    %60 = vector.broadcast %58 : vector<1x16xf32> to vector<12x16xf32>
    %61 = arith.mulf %59, %60 : vector<12x16xf32>
    %62 = arith.addf %56, %61 : vector<12x16xf32>
    %63 = vector.extract_strided_slice %39 {offsets = [0, 3], sizes = [12, 1], strides = [1, 1]} : vector<12x16xf32> to vector<12x1xf32>
    %64 = vector.extract_strided_slice %41 {offsets = [3, 0], sizes = [1, 16], strides = [1, 1]} : vector<16x16xf32> to vector<1x16xf32>
    %65 = vector.broadcast %63 : vector<12x1xf32> to vector<12x16xf32>
    %66 = vector.broadcast %64 : vector<1x16xf32> to vector<12x16xf32>
    %67 = arith.mulf %65, %66 : vector<12x16xf32>
    %68 = arith.addf %62, %67 : vector<12x16xf32>
    %69 = vector.extract_strided_slice %39 {offsets = [0, 4], sizes = [12, 1], strides = [1, 1]} : vector<12x16xf32> to vector<12x1xf32>
    %70 = vector.extract_strided_slice %41 {offsets = [4, 0], sizes = [1, 16], strides = [1, 1]} : vector<16x16xf32> to vector<1x16xf32>
    %71 = vector.broadcast %69 : vector<12x1xf32> to vector<12x16xf32>
    %72 = vector.broadcast %70 : vector<1x16xf32> to vector<12x16xf32>
    %73 = arith.mulf %71, %72 : vector<12x16xf32>
    %74 = arith.addf %68, %73 : vector<12x16xf32>
    %75 = vector.extract_strided_slice %39 {offsets = [0, 5], sizes = [12, 1], strides = [1, 1]} : vector<12x16xf32> to vector<12x1xf32>
    %76 = vector.extract_strided_slice %41 {offsets = [5, 0], sizes = [1, 16], strides = [1, 1]} : vector<16x16xf32> to vector<1x16xf32>
    %77 = vector.broadcast %75 : vector<12x1xf32> to vector<12x16xf32>
    %78 = vector.broadcast %76 : vector<1x16xf32> to vector<12x16xf32>
    %79 = arith.mulf %77, %78 : vector<12x16xf32>
    %80 = arith.addf %74, %79 : vector<12x16xf32>
    %81 = vector.extract_strided_slice %39 {offsets = [0, 6], sizes = [12, 1], strides = [1, 1]} : vector<12x16xf32> to vector<12x1xf32>
    %82 = vector.extract_strided_slice %41 {offsets = [6, 0], sizes = [1, 16], strides = [1, 1]} : vector<16x16xf32> to vector<1x16xf32>
    %83 = vector.broadcast %81 : vector<12x1xf32> to vector<12x16xf32>
    %84 = vector.broadcast %82 : vector<1x16xf32> to vector<12x16xf32>
    %85 = arith.mulf %83, %84 : vector<12x16xf32>
    %86 = arith.addf %80, %85 : vector<12x16xf32>
    %87 = vector.extract_strided_slice %39 {offsets = [0, 7], sizes = [12, 1], strides = [1, 1]} : vector<12x16xf32> to vector<12x1xf32>
    %88 = vector.extract_strided_slice %41 {offsets = [7, 0], sizes = [1, 16], strides = [1, 1]} : vector<16x16xf32> to vector<1x16xf32>
    %89 = vector.broadcast %87 : vector<12x1xf32> to vector<12x16xf32>
    %90 = vector.broadcast %88 : vector<1x16xf32> to vector<12x16xf32>
    %91 = arith.mulf %89, %90 : vector<12x16xf32>
    %92 = arith.addf %86, %91 : vector<12x16xf32>
    %93 = vector.extract_strided_slice %39 {offsets = [0, 8], sizes = [12, 1], strides = [1, 1]} : vector<12x16xf32> to vector<12x1xf32>
    %94 = vector.extract_strided_slice %41 {offsets = [8, 0], sizes = [1, 16], strides = [1, 1]} : vector<16x16xf32> to vector<1x16xf32>
    %95 = vector.broadcast %93 : vector<12x1xf32> to vector<12x16xf32>
    %96 = vector.broadcast %94 : vector<1x16xf32> to vector<12x16xf32>
    %97 = arith.mulf %95, %96 : vector<12x16xf32>
    %98 = arith.addf %92, %97 : vector<12x16xf32>
    %99 = vector.extract_strided_slice %39 {offsets = [0, 9], sizes = [12, 1], strides = [1, 1]} : vector<12x16xf32> to vector<12x1xf32>
    %100 = vector.extract_strided_slice %41 {offsets = [9, 0], sizes = [1, 16], strides = [1, 1]} : vector<16x16xf32> to vector<1x16xf32>
    %101 = vector.broadcast %99 : vector<12x1xf32> to vector<12x16xf32>
    %102 = vector.broadcast %100 : vector<1x16xf32> to vector<12x16xf32>
    %103 = arith.mulf %101, %102 : vector<12x16xf32>
    %104 = arith.addf %98, %103 : vector<12x16xf32>
    %105 = vector.extract_strided_slice %39 {offsets = [0, 10], sizes = [12, 1], strides = [1, 1]} : vector<12x16xf32> to vector<12x1xf32>
    %106 = vector.extract_strided_slice %41 {offsets = [10, 0], sizes = [1, 16], strides = [1, 1]} : vector<16x16xf32> to vector<1x16xf32>
    %107 = vector.broadcast %105 : vector<12x1xf32> to vector<12x16xf32>
    %108 = vector.broadcast %106 : vector<1x16xf32> to vector<12x16xf32>
    %109 = arith.mulf %107, %108 : vector<12x16xf32>
    %110 = arith.addf %104, %109 : vector<12x16xf32>
    %111 = vector.extract_strided_slice %39 {offsets = [0, 11], sizes = [12, 1], strides = [1, 1]} : vector<12x16xf32> to vector<12x1xf32>
    %112 = vector.extract_strided_slice %41 {offsets = [11, 0], sizes = [1, 16], strides = [1, 1]} : vector<16x16xf32> to vector<1x16xf32>
    %113 = vector.broadcast %111 : vector<12x1xf32> to vector<12x16xf32>
    %114 = vector.broadcast %112 : vector<1x16xf32> to vector<12x16xf32>
    %115 = arith.mulf %113, %114 : vector<12x16xf32>
    %116 = arith.addf %110, %115 : vector<12x16xf32>
    %117 = vector.extract_strided_slice %39 {offsets = [0, 12], sizes = [12, 1], strides = [1, 1]} : vector<12x16xf32> to vector<12x1xf32>
    %118 = vector.extract_strided_slice %41 {offsets = [12, 0], sizes = [1, 16], strides = [1, 1]} : vector<16x16xf32> to vector<1x16xf32>
    %119 = vector.broadcast %117 : vector<12x1xf32> to vector<12x16xf32>
    %120 = vector.broadcast %118 : vector<1x16xf32> to vector<12x16xf32>
    %121 = arith.mulf %119, %120 : vector<12x16xf32>
    %122 = arith.addf %116, %121 : vector<12x16xf32>
    %123 = vector.extract_strided_slice %39 {offsets = [0, 13], sizes = [12, 1], strides = [1, 1]} : vector<12x16xf32> to vector<12x1xf32>
    %124 = vector.extract_strided_slice %41 {offsets = [13, 0], sizes = [1, 16], strides = [1, 1]} : vector<16x16xf32> to vector<1x16xf32>
    %125 = vector.broadcast %123 : vector<12x1xf32> to vector<12x16xf32>
    %126 = vector.broadcast %124 : vector<1x16xf32> to vector<12x16xf32>
    %127 = arith.mulf %125, %126 : vector<12x16xf32>
    %128 = arith.addf %122, %127 : vector<12x16xf32>
    %129 = vector.extract_strided_slice %39 {offsets = [0, 14], sizes = [12, 1], strides = [1, 1]} : vector<12x16xf32> to vector<12x1xf32>
    %130 = vector.extract_strided_slice %41 {offsets = [14, 0], sizes = [1, 16], strides = [1, 1]} : vector<16x16xf32> to vector<1x16xf32>
    %131 = vector.broadcast %129 : vector<12x1xf32> to vector<12x16xf32>
    %132 = vector.broadcast %130 : vector<1x16xf32> to vector<12x16xf32>
    %133 = arith.mulf %131, %132 : vector<12x16xf32>
    %134 = arith.addf %128, %133 : vector<12x16xf32>
    %135 = vector.extract_strided_slice %39 {offsets = [0, 15], sizes = [12, 1], strides = [1, 1]} : vector<12x16xf32> to vector<12x1xf32>
    %136 = vector.extract_strided_slice %41 {offsets = [15, 0], sizes = [1, 16], strides = [1, 1]} : vector<16x16xf32> to vector<1x16xf32>
    %137 = vector.broadcast %135 : vector<12x1xf32> to vector<12x16xf32>
    %138 = vector.broadcast %136 : vector<1x16xf32> to vector<12x16xf32>
    %139 = arith.mulf %137, %138 : vector<12x16xf32>
    %140 = arith.addf %134, %139 : vector<12x16xf32>
    %141 = arith.negf %140 : vector<12x16xf32>
    %142 = math.exp %141 : vector<12x16xf32>
    %cst_18 = arith.constant 1.000000e+00 : f32
    %143 = vector.broadcast %cst_18 : f32 to vector<12x16xf32>
    %144 = arith.addf %143, %142 : vector<12x16xf32>
    %145 = arith.divf %143, %144 : vector<12x16xf32>
    %146 = vector.extract_strided_slice %38 {offsets = [16, 0], sizes = [16, 16], strides = [1, 1]} : vector<64x16xf32> to vector<16x16xf32>
    %cst_19 = arith.constant 0.000000e+00 : f32
    %147 = vector.broadcast %cst_19 : f32 to vector<12x16xf32>
    %148 = vector.broadcast %40 : vector<12x1xf32> to vector<12x16xf32>
    %149 = arith.addf %147, %148 : vector<12x16xf32>
    %150 = vector.extract_strided_slice %39 {offsets = [0, 0], sizes = [12, 1], strides = [1, 1]} : vector<12x16xf32> to vector<12x1xf32>
    %151 = vector.extract_strided_slice %146 {offsets = [0, 0], sizes = [1, 16], strides = [1, 1]} : vector<16x16xf32> to vector<1x16xf32>
    %152 = vector.broadcast %150 : vector<12x1xf32> to vector<12x16xf32>
    %153 = vector.broadcast %151 : vector<1x16xf32> to vector<12x16xf32>
    %154 = arith.mulf %152, %153 : vector<12x16xf32>
    %155 = arith.addf %149, %154 : vector<12x16xf32>
    %156 = vector.extract_strided_slice %39 {offsets = [0, 1], sizes = [12, 1], strides = [1, 1]} : vector<12x16xf32> to vector<12x1xf32>
    %157 = vector.extract_strided_slice %146 {offsets = [1, 0], sizes = [1, 16], strides = [1, 1]} : vector<16x16xf32> to vector<1x16xf32>
    %158 = vector.broadcast %156 : vector<12x1xf32> to vector<12x16xf32>
    %159 = vector.broadcast %157 : vector<1x16xf32> to vector<12x16xf32>
    %160 = arith.mulf %158, %159 : vector<12x16xf32>
    %161 = arith.addf %155, %160 : vector<12x16xf32>
    %162 = vector.extract_strided_slice %39 {offsets = [0, 2], sizes = [12, 1], strides = [1, 1]} : vector<12x16xf32> to vector<12x1xf32>
    %163 = vector.extract_strided_slice %146 {offsets = [2, 0], sizes = [1, 16], strides = [1, 1]} : vector<16x16xf32> to vector<1x16xf32>
    %164 = vector.broadcast %162 : vector<12x1xf32> to vector<12x16xf32>
    %165 = vector.broadcast %163 : vector<1x16xf32> to vector<12x16xf32>
    %166 = arith.mulf %164, %165 : vector<12x16xf32>
    %167 = arith.addf %161, %166 : vector<12x16xf32>
    %168 = vector.extract_strided_slice %39 {offsets = [0, 3], sizes = [12, 1], strides = [1, 1]} : vector<12x16xf32> to vector<12x1xf32>
    %169 = vector.extract_strided_slice %146 {offsets = [3, 0], sizes = [1, 16], strides = [1, 1]} : vector<16x16xf32> to vector<1x16xf32>
    %170 = vector.broadcast %168 : vector<12x1xf32> to vector<12x16xf32>
    %171 = vector.broadcast %169 : vector<1x16xf32> to vector<12x16xf32>
    %172 = arith.mulf %170, %171 : vector<12x16xf32>
    %173 = arith.addf %167, %172 : vector<12x16xf32>
    %174 = vector.extract_strided_slice %39 {offsets = [0, 4], sizes = [12, 1], strides = [1, 1]} : vector<12x16xf32> to vector<12x1xf32>
    %175 = vector.extract_strided_slice %146 {offsets = [4, 0], sizes = [1, 16], strides = [1, 1]} : vector<16x16xf32> to vector<1x16xf32>
    %176 = vector.broadcast %174 : vector<12x1xf32> to vector<12x16xf32>
    %177 = vector.broadcast %175 : vector<1x16xf32> to vector<12x16xf32>
    %178 = arith.mulf %176, %177 : vector<12x16xf32>
    %179 = arith.addf %173, %178 : vector<12x16xf32>
    %180 = vector.extract_strided_slice %39 {offsets = [0, 5], sizes = [12, 1], strides = [1, 1]} : vector<12x16xf32> to vector<12x1xf32>
    %181 = vector.extract_strided_slice %146 {offsets = [5, 0], sizes = [1, 16], strides = [1, 1]} : vector<16x16xf32> to vector<1x16xf32>
    %182 = vector.broadcast %180 : vector<12x1xf32> to vector<12x16xf32>
    %183 = vector.broadcast %181 : vector<1x16xf32> to vector<12x16xf32>
    %184 = arith.mulf %182, %183 : vector<12x16xf32>
    %185 = arith.addf %179, %184 : vector<12x16xf32>
    %186 = vector.extract_strided_slice %39 {offsets = [0, 6], sizes = [12, 1], strides = [1, 1]} : vector<12x16xf32> to vector<12x1xf32>
    %187 = vector.extract_strided_slice %146 {offsets = [6, 0], sizes = [1, 16], strides = [1, 1]} : vector<16x16xf32> to vector<1x16xf32>
    %188 = vector.broadcast %186 : vector<12x1xf32> to vector<12x16xf32>
    %189 = vector.broadcast %187 : vector<1x16xf32> to vector<12x16xf32>
    %190 = arith.mulf %188, %189 : vector<12x16xf32>
    %191 = arith.addf %185, %190 : vector<12x16xf32>
    %192 = vector.extract_strided_slice %39 {offsets = [0, 7], sizes = [12, 1], strides = [1, 1]} : vector<12x16xf32> to vector<12x1xf32>
    %193 = vector.extract_strided_slice %146 {offsets = [7, 0], sizes = [1, 16], strides = [1, 1]} : vector<16x16xf32> to vector<1x16xf32>
    %194 = vector.broadcast %192 : vector<12x1xf32> to vector<12x16xf32>
    %195 = vector.broadcast %193 : vector<1x16xf32> to vector<12x16xf32>
    %196 = arith.mulf %194, %195 : vector<12x16xf32>
    %197 = arith.addf %191, %196 : vector<12x16xf32>
    %198 = vector.extract_strided_slice %39 {offsets = [0, 8], sizes = [12, 1], strides = [1, 1]} : vector<12x16xf32> to vector<12x1xf32>
    %199 = vector.extract_strided_slice %146 {offsets = [8, 0], sizes = [1, 16], strides = [1, 1]} : vector<16x16xf32> to vector<1x16xf32>
    %200 = vector.broadcast %198 : vector<12x1xf32> to vector<12x16xf32>
    %201 = vector.broadcast %199 : vector<1x16xf32> to vector<12x16xf32>
    %202 = arith.mulf %200, %201 : vector<12x16xf32>
    %203 = arith.addf %197, %202 : vector<12x16xf32>
    %204 = vector.extract_strided_slice %39 {offsets = [0, 9], sizes = [12, 1], strides = [1, 1]} : vector<12x16xf32> to vector<12x1xf32>
    %205 = vector.extract_strided_slice %146 {offsets = [9, 0], sizes = [1, 16], strides = [1, 1]} : vector<16x16xf32> to vector<1x16xf32>
    %206 = vector.broadcast %204 : vector<12x1xf32> to vector<12x16xf32>
    %207 = vector.broadcast %205 : vector<1x16xf32> to vector<12x16xf32>
    %208 = arith.mulf %206, %207 : vector<12x16xf32>
    %209 = arith.addf %203, %208 : vector<12x16xf32>
    %210 = vector.extract_strided_slice %39 {offsets = [0, 10], sizes = [12, 1], strides = [1, 1]} : vector<12x16xf32> to vector<12x1xf32>
    %211 = vector.extract_strided_slice %146 {offsets = [10, 0], sizes = [1, 16], strides = [1, 1]} : vector<16x16xf32> to vector<1x16xf32>
    %212 = vector.broadcast %210 : vector<12x1xf32> to vector<12x16xf32>
    %213 = vector.broadcast %211 : vector<1x16xf32> to vector<12x16xf32>
    %214 = arith.mulf %212, %213 : vector<12x16xf32>
    %215 = arith.addf %209, %214 : vector<12x16xf32>
    %216 = vector.extract_strided_slice %39 {offsets = [0, 11], sizes = [12, 1], strides = [1, 1]} : vector<12x16xf32> to vector<12x1xf32>
    %217 = vector.extract_strided_slice %146 {offsets = [11, 0], sizes = [1, 16], strides = [1, 1]} : vector<16x16xf32> to vector<1x16xf32>
    %218 = vector.broadcast %216 : vector<12x1xf32> to vector<12x16xf32>
    %219 = vector.broadcast %217 : vector<1x16xf32> to vector<12x16xf32>
    %220 = arith.mulf %218, %219 : vector<12x16xf32>
    %221 = arith.addf %215, %220 : vector<12x16xf32>
    %222 = vector.extract_strided_slice %39 {offsets = [0, 12], sizes = [12, 1], strides = [1, 1]} : vector<12x16xf32> to vector<12x1xf32>
    %223 = vector.extract_strided_slice %146 {offsets = [12, 0], sizes = [1, 16], strides = [1, 1]} : vector<16x16xf32> to vector<1x16xf32>
    %224 = vector.broadcast %222 : vector<12x1xf32> to vector<12x16xf32>
    %225 = vector.broadcast %223 : vector<1x16xf32> to vector<12x16xf32>
    %226 = arith.mulf %224, %225 : vector<12x16xf32>
    %227 = arith.addf %221, %226 : vector<12x16xf32>
    %228 = vector.extract_strided_slice %39 {offsets = [0, 13], sizes = [12, 1], strides = [1, 1]} : vector<12x16xf32> to vector<12x1xf32>
    %229 = vector.extract_strided_slice %146 {offsets = [13, 0], sizes = [1, 16], strides = [1, 1]} : vector<16x16xf32> to vector<1x16xf32>
    %230 = vector.broadcast %228 : vector<12x1xf32> to vector<12x16xf32>
    %231 = vector.broadcast %229 : vector<1x16xf32> to vector<12x16xf32>
    %232 = arith.mulf %230, %231 : vector<12x16xf32>
    %233 = arith.addf %227, %232 : vector<12x16xf32>
    %234 = vector.extract_strided_slice %39 {offsets = [0, 14], sizes = [12, 1], strides = [1, 1]} : vector<12x16xf32> to vector<12x1xf32>
    %235 = vector.extract_strided_slice %146 {offsets = [14, 0], sizes = [1, 16], strides = [1, 1]} : vector<16x16xf32> to vector<1x16xf32>
    %236 = vector.broadcast %234 : vector<12x1xf32> to vector<12x16xf32>
    %237 = vector.broadcast %235 : vector<1x16xf32> to vector<12x16xf32>
    %238 = arith.mulf %236, %237 : vector<12x16xf32>
    %239 = arith.addf %233, %238 : vector<12x16xf32>
    %240 = vector.extract_strided_slice %39 {offsets = [0, 15], sizes = [12, 1], strides = [1, 1]} : vector<12x16xf32> to vector<12x1xf32>
    %241 = vector.extract_strided_slice %146 {offsets = [15, 0], sizes = [1, 16], strides = [1, 1]} : vector<16x16xf32> to vector<1x16xf32>
    %242 = vector.broadcast %240 : vector<12x1xf32> to vector<12x16xf32>
    %243 = vector.broadcast %241 : vector<1x16xf32> to vector<12x16xf32>
    %244 = arith.mulf %242, %243 : vector<12x16xf32>
    %245 = arith.addf %239, %244 : vector<12x16xf32>
    %246 = arith.negf %245 : vector<12x16xf32>
    %247 = math.exp %246 : vector<12x16xf32>
    %cst_20 = arith.constant 1.000000e+00 : f32
    %248 = vector.broadcast %cst_20 : f32 to vector<12x16xf32>
    %249 = arith.addf %248, %247 : vector<12x16xf32>
    %250 = arith.divf %248, %249 : vector<12x16xf32>
    %251 = vector.extract_strided_slice %38 {offsets = [32, 0], sizes = [16, 16], strides = [1, 1]} : vector<64x16xf32> to vector<16x16xf32>
    %cst_21 = arith.constant 0.000000e+00 : f32
    %252 = vector.broadcast %cst_21 : f32 to vector<12x16xf32>
    %253 = vector.broadcast %40 : vector<12x1xf32> to vector<12x16xf32>
    %254 = arith.addf %252, %253 : vector<12x16xf32>
    %255 = vector.extract_strided_slice %39 {offsets = [0, 0], sizes = [12, 1], strides = [1, 1]} : vector<12x16xf32> to vector<12x1xf32>
    %256 = vector.extract_strided_slice %251 {offsets = [0, 0], sizes = [1, 16], strides = [1, 1]} : vector<16x16xf32> to vector<1x16xf32>
    %257 = vector.broadcast %255 : vector<12x1xf32> to vector<12x16xf32>
    %258 = vector.broadcast %256 : vector<1x16xf32> to vector<12x16xf32>
    %259 = arith.mulf %257, %258 : vector<12x16xf32>
    %260 = arith.addf %254, %259 : vector<12x16xf32>
    %261 = vector.extract_strided_slice %39 {offsets = [0, 1], sizes = [12, 1], strides = [1, 1]} : vector<12x16xf32> to vector<12x1xf32>
    %262 = vector.extract_strided_slice %251 {offsets = [1, 0], sizes = [1, 16], strides = [1, 1]} : vector<16x16xf32> to vector<1x16xf32>
    %263 = vector.broadcast %261 : vector<12x1xf32> to vector<12x16xf32>
    %264 = vector.broadcast %262 : vector<1x16xf32> to vector<12x16xf32>
    %265 = arith.mulf %263, %264 : vector<12x16xf32>
    %266 = arith.addf %260, %265 : vector<12x16xf32>
    %267 = vector.extract_strided_slice %39 {offsets = [0, 2], sizes = [12, 1], strides = [1, 1]} : vector<12x16xf32> to vector<12x1xf32>
    %268 = vector.extract_strided_slice %251 {offsets = [2, 0], sizes = [1, 16], strides = [1, 1]} : vector<16x16xf32> to vector<1x16xf32>
    %269 = vector.broadcast %267 : vector<12x1xf32> to vector<12x16xf32>
    %270 = vector.broadcast %268 : vector<1x16xf32> to vector<12x16xf32>
    %271 = arith.mulf %269, %270 : vector<12x16xf32>
    %272 = arith.addf %266, %271 : vector<12x16xf32>
    %273 = vector.extract_strided_slice %39 {offsets = [0, 3], sizes = [12, 1], strides = [1, 1]} : vector<12x16xf32> to vector<12x1xf32>
    %274 = vector.extract_strided_slice %251 {offsets = [3, 0], sizes = [1, 16], strides = [1, 1]} : vector<16x16xf32> to vector<1x16xf32>
    %275 = vector.broadcast %273 : vector<12x1xf32> to vector<12x16xf32>
    %276 = vector.broadcast %274 : vector<1x16xf32> to vector<12x16xf32>
    %277 = arith.mulf %275, %276 : vector<12x16xf32>
    %278 = arith.addf %272, %277 : vector<12x16xf32>
    %279 = vector.extract_strided_slice %39 {offsets = [0, 4], sizes = [12, 1], strides = [1, 1]} : vector<12x16xf32> to vector<12x1xf32>
    %280 = vector.extract_strided_slice %251 {offsets = [4, 0], sizes = [1, 16], strides = [1, 1]} : vector<16x16xf32> to vector<1x16xf32>
    %281 = vector.broadcast %279 : vector<12x1xf32> to vector<12x16xf32>
    %282 = vector.broadcast %280 : vector<1x16xf32> to vector<12x16xf32>
    %283 = arith.mulf %281, %282 : vector<12x16xf32>
    %284 = arith.addf %278, %283 : vector<12x16xf32>
    %285 = vector.extract_strided_slice %39 {offsets = [0, 5], sizes = [12, 1], strides = [1, 1]} : vector<12x16xf32> to vector<12x1xf32>
    %286 = vector.extract_strided_slice %251 {offsets = [5, 0], sizes = [1, 16], strides = [1, 1]} : vector<16x16xf32> to vector<1x16xf32>
    %287 = vector.broadcast %285 : vector<12x1xf32> to vector<12x16xf32>
    %288 = vector.broadcast %286 : vector<1x16xf32> to vector<12x16xf32>
    %289 = arith.mulf %287, %288 : vector<12x16xf32>
    %290 = arith.addf %284, %289 : vector<12x16xf32>
    %291 = vector.extract_strided_slice %39 {offsets = [0, 6], sizes = [12, 1], strides = [1, 1]} : vector<12x16xf32> to vector<12x1xf32>
    %292 = vector.extract_strided_slice %251 {offsets = [6, 0], sizes = [1, 16], strides = [1, 1]} : vector<16x16xf32> to vector<1x16xf32>
    %293 = vector.broadcast %291 : vector<12x1xf32> to vector<12x16xf32>
    %294 = vector.broadcast %292 : vector<1x16xf32> to vector<12x16xf32>
    %295 = arith.mulf %293, %294 : vector<12x16xf32>
    %296 = arith.addf %290, %295 : vector<12x16xf32>
    %297 = vector.extract_strided_slice %39 {offsets = [0, 7], sizes = [12, 1], strides = [1, 1]} : vector<12x16xf32> to vector<12x1xf32>
    %298 = vector.extract_strided_slice %251 {offsets = [7, 0], sizes = [1, 16], strides = [1, 1]} : vector<16x16xf32> to vector<1x16xf32>
    %299 = vector.broadcast %297 : vector<12x1xf32> to vector<12x16xf32>
    %300 = vector.broadcast %298 : vector<1x16xf32> to vector<12x16xf32>
    %301 = arith.mulf %299, %300 : vector<12x16xf32>
    %302 = arith.addf %296, %301 : vector<12x16xf32>
    %303 = vector.extract_strided_slice %39 {offsets = [0, 8], sizes = [12, 1], strides = [1, 1]} : vector<12x16xf32> to vector<12x1xf32>
    %304 = vector.extract_strided_slice %251 {offsets = [8, 0], sizes = [1, 16], strides = [1, 1]} : vector<16x16xf32> to vector<1x16xf32>
    %305 = vector.broadcast %303 : vector<12x1xf32> to vector<12x16xf32>
    %306 = vector.broadcast %304 : vector<1x16xf32> to vector<12x16xf32>
    %307 = arith.mulf %305, %306 : vector<12x16xf32>
    %308 = arith.addf %302, %307 : vector<12x16xf32>
    %309 = vector.extract_strided_slice %39 {offsets = [0, 9], sizes = [12, 1], strides = [1, 1]} : vector<12x16xf32> to vector<12x1xf32>
    %310 = vector.extract_strided_slice %251 {offsets = [9, 0], sizes = [1, 16], strides = [1, 1]} : vector<16x16xf32> to vector<1x16xf32>
    %311 = vector.broadcast %309 : vector<12x1xf32> to vector<12x16xf32>
    %312 = vector.broadcast %310 : vector<1x16xf32> to vector<12x16xf32>
    %313 = arith.mulf %311, %312 : vector<12x16xf32>
    %314 = arith.addf %308, %313 : vector<12x16xf32>
    %315 = vector.extract_strided_slice %39 {offsets = [0, 10], sizes = [12, 1], strides = [1, 1]} : vector<12x16xf32> to vector<12x1xf32>
    %316 = vector.extract_strided_slice %251 {offsets = [10, 0], sizes = [1, 16], strides = [1, 1]} : vector<16x16xf32> to vector<1x16xf32>
    %317 = vector.broadcast %315 : vector<12x1xf32> to vector<12x16xf32>
    %318 = vector.broadcast %316 : vector<1x16xf32> to vector<12x16xf32>
    %319 = arith.mulf %317, %318 : vector<12x16xf32>
    %320 = arith.addf %314, %319 : vector<12x16xf32>
    %321 = vector.extract_strided_slice %39 {offsets = [0, 11], sizes = [12, 1], strides = [1, 1]} : vector<12x16xf32> to vector<12x1xf32>
    %322 = vector.extract_strided_slice %251 {offsets = [11, 0], sizes = [1, 16], strides = [1, 1]} : vector<16x16xf32> to vector<1x16xf32>
    %323 = vector.broadcast %321 : vector<12x1xf32> to vector<12x16xf32>
    %324 = vector.broadcast %322 : vector<1x16xf32> to vector<12x16xf32>
    %325 = arith.mulf %323, %324 : vector<12x16xf32>
    %326 = arith.addf %320, %325 : vector<12x16xf32>
    %327 = vector.extract_strided_slice %39 {offsets = [0, 12], sizes = [12, 1], strides = [1, 1]} : vector<12x16xf32> to vector<12x1xf32>
    %328 = vector.extract_strided_slice %251 {offsets = [12, 0], sizes = [1, 16], strides = [1, 1]} : vector<16x16xf32> to vector<1x16xf32>
    %329 = vector.broadcast %327 : vector<12x1xf32> to vector<12x16xf32>
    %330 = vector.broadcast %328 : vector<1x16xf32> to vector<12x16xf32>
    %331 = arith.mulf %329, %330 : vector<12x16xf32>
    %332 = arith.addf %326, %331 : vector<12x16xf32>
    %333 = vector.extract_strided_slice %39 {offsets = [0, 13], sizes = [12, 1], strides = [1, 1]} : vector<12x16xf32> to vector<12x1xf32>
    %334 = vector.extract_strided_slice %251 {offsets = [13, 0], sizes = [1, 16], strides = [1, 1]} : vector<16x16xf32> to vector<1x16xf32>
    %335 = vector.broadcast %333 : vector<12x1xf32> to vector<12x16xf32>
    %336 = vector.broadcast %334 : vector<1x16xf32> to vector<12x16xf32>
    %337 = arith.mulf %335, %336 : vector<12x16xf32>
    %338 = arith.addf %332, %337 : vector<12x16xf32>
    %339 = vector.extract_strided_slice %39 {offsets = [0, 14], sizes = [12, 1], strides = [1, 1]} : vector<12x16xf32> to vector<12x1xf32>
    %340 = vector.extract_strided_slice %251 {offsets = [14, 0], sizes = [1, 16], strides = [1, 1]} : vector<16x16xf32> to vector<1x16xf32>
    %341 = vector.broadcast %339 : vector<12x1xf32> to vector<12x16xf32>
    %342 = vector.broadcast %340 : vector<1x16xf32> to vector<12x16xf32>
    %343 = arith.mulf %341, %342 : vector<12x16xf32>
    %344 = arith.addf %338, %343 : vector<12x16xf32>
    %345 = vector.extract_strided_slice %39 {offsets = [0, 15], sizes = [12, 1], strides = [1, 1]} : vector<12x16xf32> to vector<12x1xf32>
    %346 = vector.extract_strided_slice %251 {offsets = [15, 0], sizes = [1, 16], strides = [1, 1]} : vector<16x16xf32> to vector<1x16xf32>
    %347 = vector.broadcast %345 : vector<12x1xf32> to vector<12x16xf32>
    %348 = vector.broadcast %346 : vector<1x16xf32> to vector<12x16xf32>
    %349 = arith.mulf %347, %348 : vector<12x16xf32>
    %350 = arith.addf %344, %349 : vector<12x16xf32>
    %351 = arith.negf %350 : vector<12x16xf32>
    %352 = math.exp %351 : vector<12x16xf32>
    %cst_22 = arith.constant 1.000000e+00 : f32
    %353 = vector.broadcast %cst_22 : f32 to vector<12x16xf32>
    %354 = arith.addf %353, %352 : vector<12x16xf32>
    %355 = arith.divf %353, %354 : vector<12x16xf32>
    %356 = vector.extract_strided_slice %38 {offsets = [48, 0], sizes = [16, 16], strides = [1, 1]} : vector<64x16xf32> to vector<16x16xf32>
    %cst_23 = arith.constant 0.000000e+00 : f32
    %357 = vector.broadcast %cst_23 : f32 to vector<12x16xf32>
    %358 = vector.broadcast %40 : vector<12x1xf32> to vector<12x16xf32>
    %359 = arith.addf %357, %358 : vector<12x16xf32>
    %360 = vector.extract_strided_slice %39 {offsets = [0, 0], sizes = [12, 1], strides = [1, 1]} : vector<12x16xf32> to vector<12x1xf32>
    %361 = vector.extract_strided_slice %356 {offsets = [0, 0], sizes = [1, 16], strides = [1, 1]} : vector<16x16xf32> to vector<1x16xf32>
    %362 = vector.broadcast %360 : vector<12x1xf32> to vector<12x16xf32>
    %363 = vector.broadcast %361 : vector<1x16xf32> to vector<12x16xf32>
    %364 = arith.mulf %362, %363 : vector<12x16xf32>
    %365 = arith.addf %359, %364 : vector<12x16xf32>
    %366 = vector.extract_strided_slice %39 {offsets = [0, 1], sizes = [12, 1], strides = [1, 1]} : vector<12x16xf32> to vector<12x1xf32>
    %367 = vector.extract_strided_slice %356 {offsets = [1, 0], sizes = [1, 16], strides = [1, 1]} : vector<16x16xf32> to vector<1x16xf32>
    %368 = vector.broadcast %366 : vector<12x1xf32> to vector<12x16xf32>
    %369 = vector.broadcast %367 : vector<1x16xf32> to vector<12x16xf32>
    %370 = arith.mulf %368, %369 : vector<12x16xf32>
    %371 = arith.addf %365, %370 : vector<12x16xf32>
    %372 = vector.extract_strided_slice %39 {offsets = [0, 2], sizes = [12, 1], strides = [1, 1]} : vector<12x16xf32> to vector<12x1xf32>
    %373 = vector.extract_strided_slice %356 {offsets = [2, 0], sizes = [1, 16], strides = [1, 1]} : vector<16x16xf32> to vector<1x16xf32>
    %374 = vector.broadcast %372 : vector<12x1xf32> to vector<12x16xf32>
    %375 = vector.broadcast %373 : vector<1x16xf32> to vector<12x16xf32>
    %376 = arith.mulf %374, %375 : vector<12x16xf32>
    %377 = arith.addf %371, %376 : vector<12x16xf32>
    %378 = vector.extract_strided_slice %39 {offsets = [0, 3], sizes = [12, 1], strides = [1, 1]} : vector<12x16xf32> to vector<12x1xf32>
    %379 = vector.extract_strided_slice %356 {offsets = [3, 0], sizes = [1, 16], strides = [1, 1]} : vector<16x16xf32> to vector<1x16xf32>
    %380 = vector.broadcast %378 : vector<12x1xf32> to vector<12x16xf32>
    %381 = vector.broadcast %379 : vector<1x16xf32> to vector<12x16xf32>
    %382 = arith.mulf %380, %381 : vector<12x16xf32>
    %383 = arith.addf %377, %382 : vector<12x16xf32>
    %384 = vector.extract_strided_slice %39 {offsets = [0, 4], sizes = [12, 1], strides = [1, 1]} : vector<12x16xf32> to vector<12x1xf32>
    %385 = vector.extract_strided_slice %356 {offsets = [4, 0], sizes = [1, 16], strides = [1, 1]} : vector<16x16xf32> to vector<1x16xf32>
    %386 = vector.broadcast %384 : vector<12x1xf32> to vector<12x16xf32>
    %387 = vector.broadcast %385 : vector<1x16xf32> to vector<12x16xf32>
    %388 = arith.mulf %386, %387 : vector<12x16xf32>
    %389 = arith.addf %383, %388 : vector<12x16xf32>
    %390 = vector.extract_strided_slice %39 {offsets = [0, 5], sizes = [12, 1], strides = [1, 1]} : vector<12x16xf32> to vector<12x1xf32>
    %391 = vector.extract_strided_slice %356 {offsets = [5, 0], sizes = [1, 16], strides = [1, 1]} : vector<16x16xf32> to vector<1x16xf32>
    %392 = vector.broadcast %390 : vector<12x1xf32> to vector<12x16xf32>
    %393 = vector.broadcast %391 : vector<1x16xf32> to vector<12x16xf32>
    %394 = arith.mulf %392, %393 : vector<12x16xf32>
    %395 = arith.addf %389, %394 : vector<12x16xf32>
    %396 = vector.extract_strided_slice %39 {offsets = [0, 6], sizes = [12, 1], strides = [1, 1]} : vector<12x16xf32> to vector<12x1xf32>
    %397 = vector.extract_strided_slice %356 {offsets = [6, 0], sizes = [1, 16], strides = [1, 1]} : vector<16x16xf32> to vector<1x16xf32>
    %398 = vector.broadcast %396 : vector<12x1xf32> to vector<12x16xf32>
    %399 = vector.broadcast %397 : vector<1x16xf32> to vector<12x16xf32>
    %400 = arith.mulf %398, %399 : vector<12x16xf32>
    %401 = arith.addf %395, %400 : vector<12x16xf32>
    %402 = vector.extract_strided_slice %39 {offsets = [0, 7], sizes = [12, 1], strides = [1, 1]} : vector<12x16xf32> to vector<12x1xf32>
    %403 = vector.extract_strided_slice %356 {offsets = [7, 0], sizes = [1, 16], strides = [1, 1]} : vector<16x16xf32> to vector<1x16xf32>
    %404 = vector.broadcast %402 : vector<12x1xf32> to vector<12x16xf32>
    %405 = vector.broadcast %403 : vector<1x16xf32> to vector<12x16xf32>
    %406 = arith.mulf %404, %405 : vector<12x16xf32>
    %407 = arith.addf %401, %406 : vector<12x16xf32>
    %408 = vector.extract_strided_slice %39 {offsets = [0, 8], sizes = [12, 1], strides = [1, 1]} : vector<12x16xf32> to vector<12x1xf32>
    %409 = vector.extract_strided_slice %356 {offsets = [8, 0], sizes = [1, 16], strides = [1, 1]} : vector<16x16xf32> to vector<1x16xf32>
    %410 = vector.broadcast %408 : vector<12x1xf32> to vector<12x16xf32>
    %411 = vector.broadcast %409 : vector<1x16xf32> to vector<12x16xf32>
    %412 = arith.mulf %410, %411 : vector<12x16xf32>
    %413 = arith.addf %407, %412 : vector<12x16xf32>
    %414 = vector.extract_strided_slice %39 {offsets = [0, 9], sizes = [12, 1], strides = [1, 1]} : vector<12x16xf32> to vector<12x1xf32>
    %415 = vector.extract_strided_slice %356 {offsets = [9, 0], sizes = [1, 16], strides = [1, 1]} : vector<16x16xf32> to vector<1x16xf32>
    %416 = vector.broadcast %414 : vector<12x1xf32> to vector<12x16xf32>
    %417 = vector.broadcast %415 : vector<1x16xf32> to vector<12x16xf32>
    %418 = arith.mulf %416, %417 : vector<12x16xf32>
    %419 = arith.addf %413, %418 : vector<12x16xf32>
    %420 = vector.extract_strided_slice %39 {offsets = [0, 10], sizes = [12, 1], strides = [1, 1]} : vector<12x16xf32> to vector<12x1xf32>
    %421 = vector.extract_strided_slice %356 {offsets = [10, 0], sizes = [1, 16], strides = [1, 1]} : vector<16x16xf32> to vector<1x16xf32>
    %422 = vector.broadcast %420 : vector<12x1xf32> to vector<12x16xf32>
    %423 = vector.broadcast %421 : vector<1x16xf32> to vector<12x16xf32>
    %424 = arith.mulf %422, %423 : vector<12x16xf32>
    %425 = arith.addf %419, %424 : vector<12x16xf32>
    %426 = vector.extract_strided_slice %39 {offsets = [0, 11], sizes = [12, 1], strides = [1, 1]} : vector<12x16xf32> to vector<12x1xf32>
    %427 = vector.extract_strided_slice %356 {offsets = [11, 0], sizes = [1, 16], strides = [1, 1]} : vector<16x16xf32> to vector<1x16xf32>
    %428 = vector.broadcast %426 : vector<12x1xf32> to vector<12x16xf32>
    %429 = vector.broadcast %427 : vector<1x16xf32> to vector<12x16xf32>
    %430 = arith.mulf %428, %429 : vector<12x16xf32>
    %431 = arith.addf %425, %430 : vector<12x16xf32>
    %432 = vector.extract_strided_slice %39 {offsets = [0, 12], sizes = [12, 1], strides = [1, 1]} : vector<12x16xf32> to vector<12x1xf32>
    %433 = vector.extract_strided_slice %356 {offsets = [12, 0], sizes = [1, 16], strides = [1, 1]} : vector<16x16xf32> to vector<1x16xf32>
    %434 = vector.broadcast %432 : vector<12x1xf32> to vector<12x16xf32>
    %435 = vector.broadcast %433 : vector<1x16xf32> to vector<12x16xf32>
    %436 = arith.mulf %434, %435 : vector<12x16xf32>
    %437 = arith.addf %431, %436 : vector<12x16xf32>
    %438 = vector.extract_strided_slice %39 {offsets = [0, 13], sizes = [12, 1], strides = [1, 1]} : vector<12x16xf32> to vector<12x1xf32>
    %439 = vector.extract_strided_slice %356 {offsets = [13, 0], sizes = [1, 16], strides = [1, 1]} : vector<16x16xf32> to vector<1x16xf32>
    %440 = vector.broadcast %438 : vector<12x1xf32> to vector<12x16xf32>
    %441 = vector.broadcast %439 : vector<1x16xf32> to vector<12x16xf32>
    %442 = arith.mulf %440, %441 : vector<12x16xf32>
    %443 = arith.addf %437, %442 : vector<12x16xf32>
    %444 = vector.extract_strided_slice %39 {offsets = [0, 14], sizes = [12, 1], strides = [1, 1]} : vector<12x16xf32> to vector<12x1xf32>
    %445 = vector.extract_strided_slice %356 {offsets = [14, 0], sizes = [1, 16], strides = [1, 1]} : vector<16x16xf32> to vector<1x16xf32>
    %446 = vector.broadcast %444 : vector<12x1xf32> to vector<12x16xf32>
    %447 = vector.broadcast %445 : vector<1x16xf32> to vector<12x16xf32>
    %448 = arith.mulf %446, %447 : vector<12x16xf32>
    %449 = arith.addf %443, %448 : vector<12x16xf32>
    %450 = vector.extract_strided_slice %39 {offsets = [0, 15], sizes = [12, 1], strides = [1, 1]} : vector<12x16xf32> to vector<12x1xf32>
    %451 = vector.extract_strided_slice %356 {offsets = [15, 0], sizes = [1, 16], strides = [1, 1]} : vector<16x16xf32> to vector<1x16xf32>
    %452 = vector.broadcast %450 : vector<12x1xf32> to vector<12x16xf32>
    %453 = vector.broadcast %451 : vector<1x16xf32> to vector<12x16xf32>
    %454 = arith.mulf %452, %453 : vector<12x16xf32>
    %455 = arith.addf %449, %454 : vector<12x16xf32>
    %456 = arith.negf %455 : vector<12x16xf32>
    %457 = math.exp %456 : vector<12x16xf32>
    %cst_24 = arith.constant 1.000000e+00 : f32
    %458 = vector.broadcast %cst_24 : f32 to vector<12x16xf32>
    %459 = arith.addf %458, %457 : vector<12x16xf32>
    %460 = arith.divf %458, %459 : vector<12x16xf32>
    %461 = tpu.concatenate %145, %250, %355, %460 in 0 : vector<12x16xf32>, vector<12x16xf32>, vector<12x16xf32>, vector<12x16xf32> -> vector<48x16xf32>
    %c0_25 = arith.constant 0 : index
    %c0_26 = arith.constant 0 : index
    %c0_27 = arith.constant 0 : index
    %462 = vector.load %arg8[%c0_25, %c0_26, %c0_27] : memref<1x48x16xf32, #tpu.memory_space<vmem>>, vector<1x48x16xf32>
    %463 = vector.shape_cast %462 : vector<1x48x16xf32> to vector<48x16xf32>
    %464 = vector.shape_cast %461 : vector<48x16xf32> to vector<1x48x16xf32>
    tpu.vector_store %arg8[%c0_25, %c0_26, %c0_27], %464 {strides = array<i32>} : memref<1x48x16xf32, #tpu.memory_space<vmem>>, vector<1x48x16xf32>,
    return
  }
  func.func @transform_0(%arg0: i32) -> (i32, i32, i32) {
    %c0_i32 = arith.constant 0 : i32
    %c0_i32_0 = arith.constant 0 : i32
    %c0_i32_1 = arith.constant 0 : i32
    return %arg0, %c0_i32, %c0_i32_0 : i32, i32, i32
  }
  func.func @transform_1(%arg0: i32) -> (i32, i32) {
    %c0_i32 = arith.constant 0 : i32
    %c0_i32_0 = arith.constant 0 : i32
    %c0_i32_1 = arith.constant 0 : i32
    return %c0_i32, %c0_i32_0 : i32, i32
  }
  func.func @transform_2(%arg0: i32) -> (i32, i32) {
    %c0_i32 = arith.constant 0 : i32
    %c0_i32_0 = arith.constant 0 : i32
    %c0_i32_1 = arith.constant 0 : i32
    return %c0_i32, %c0_i32_0 : i32, i32
  }
  func.func @transform_3(%arg0: i32) -> (i32, i32) {
    %c0_i32 = arith.constant 0 : i32
    %c0_i32_0 = arith.constant 0 : i32
    %c0_i32_1 = arith.constant 0 : i32
    return %c0_i32, %c0_i32_0 : i32, i32
  }
  func.func @transform_4(%arg0: i32) -> (i32, i32) {
    %c0_i32 = arith.constant 0 : i32
    %c0_i32_0 = arith.constant 0 : i32
    %c0_i32_1 = arith.constant 0 : i32
    return %c0_i32, %c0_i32_0 : i32, i32
  }
  func.func @transform_5(%arg0: i32) -> (i32, i32) {
    %c0_i32 = arith.constant 0 : i32
    %c0_i32_0 = arith.constant 0 : i32
    %c0_i32_1 = arith.constant 0 : i32
    return %c0_i32, %c0_i32_0 : i32, i32
  }
  func.func @transform_6(%arg0: i32) -> (i32, i32) {
    %c0_i32 = arith.constant 0 : i32
    %c0_i32_0 = arith.constant 0 : i32
    %c0_i32_1 = arith.constant 0 : i32
    return %c0_i32, %c0_i32_0 : i32, i32
  }
  func.func @transform_7(%arg0: i32) -> (i32, i32, i32) {
    %c0_i32 = arith.constant 0 : i32
    %c0_i32_0 = arith.constant 0 : i32
    %c0_i32_1 = arith.constant 0 : i32
    return %arg0, %c0_i32, %c0_i32_0 : i32, i32, i32
  }
}

</mosaic_0001>

<llo_original>
// kernel: _lambda_.1
$region0: #{_lambda_.1}
  #allocation0 [shape = 'u32[]', space=smem, size = 0x4, offset = 0x4, fixed_abs, tag = 'smem constant byte address 0x4 - core index']
  #allocation1 [shape = 'u32[144,128]{1,0:T(1,128)}', space=vmem, size = 0x12000, scoped, tag = 'internal scratch']
  %s0 = inlined_call_operand.hbm [shape: f32[2,1,32], index: 0, kind: input, shape index: {}]
  %s1 = inlined_call_operand.hbm [shape: f32[32,64], index: 1, kind: input, shape index: {}]
  %s2 = inlined_call_operand.vmem [shape: f32[1,64], index: 2, kind: input, shape index: {}]
  %s3 = inlined_call_operand.hbm [shape: f32[64,4], index: 3, kind: input, shape index: {}]
  %s4 = inlined_call_operand.hbm [shape: f32[64,1], index: 4, kind: input, shape index: {}]
  %s5 = inlined_call_operand.hbm [shape: f32[12,16], index: 5, kind: input, shape index: {}]
  %s6 = inlined_call_operand.hbm [shape: f32[12,1], index: 6, kind: input, shape index: {}]
  %s7 = inlined_call_operand.vmem [shape: f32[2,48,16], index: 7, kind: output, shape index: {}]
  %s8 = sld [smem:[#allocation0]]
  $region85: #{_lambda_.1} parent=0
    _
  %s10 = ssub.s32 1, %s8
  %s11 = scalar_select 0, %s10, %s8
  $region1: #{_lambda_.1} parent=0
    #allocation2 [shape = 'u8[1024]{0}', space=vmem, size = 0x400, scoped, tag = 'input window, operand 0']
    #allocation3 [shape = 's32[2]{0}', space=sflag, size = 0x8, scoped, tag = 'scoped memory for _lambda_.1']
    #allocation4 [shape = 'u8[16384]{0}', space=vmem, size = 0x4000, scoped, tag = 'input window, operand 1, single buffered']
    #allocation5 [shape = 's32[1]{0}', space=sflag, size = 0x4, scoped, tag = 'scoped memory for _lambda_.1']
    #allocation6 [shape = 'u8[32768]{0}', space=vmem, size = 0x8000, scoped, tag = 'input window, operand 3, single buffered']
    #allocation7 [shape = 'u8[32768]{0}', space=vmem, size = 0x8000, scoped, tag = 'input window, operand 4, single buffered']
    #allocation8 [shape = 's32[1]{0}', space=sflag, size = 0x4, scoped, tag = 'scoped memory for _lambda_.1']
    #allocation9 [shape = 'u8[8192]{0}', space=vmem, size = 0x2000, scoped, tag = 'input window, operand 5, single buffered']
    #allocation10 [shape = 'u8[8192]{0}', space=vmem, size = 0x2000, scoped, tag = 'input window, operand 6, single buffered']
    #allocation11 [shape = 's32[1]{0}', space=sflag, size = 0x4, scoped, tag = 'scoped memory for _lambda_.1']
    %12 = vsyncpa [#allocation3], 0
    %s13 = scalar_lea.sflag [#allocation3], 1
    %14 = vsyncpa %s13, 0
    %15 = vsyncpa [#allocation5], 0
    %16 = vsyncpa [#allocation8], 0
    %17 = vsyncpa [#allocation11], 0
    loop: start=0, step=1, limit=4
    $region2: #{_lambda_.1} parent=1 // loop_pre_header
      _
    $region3: #{_lambda_.1} parent=1 // loop_header
      %s19 = sphi 0, %s23
      %p20 = scmp.ge.s32.totalorder %s19, 4
      %s29 = sphi 0, %s31
      %s32 = sphi 0, %s29
      %s33 = sphi 0, %s32
      %s49 = sphi 0, %s33
      %s53 = sphi 0, %s53
      %s55 = sphi 0, %s53
      %s56 = sphi 0, %s55
      %s70 = sphi 0, %s56
      %s74 = sphi 0, %s74
      %s76 = sphi 0, %s74
      %s77 = sphi 0, %s76
      %s91 = sphi 0, %s77
      %s95 = sphi 0, %s95
      %s97 = sphi 0, %s95
      %s98 = sphi 0, %s97
      %s112 = sphi 0, %s98
      %s116 = sphi 0, %s116
      %s118 = sphi 0, %s116
      %s119 = sphi 0, %s118
      %s133 = sphi 0, %s119
      %s137 = sphi 0, %s137
      %s139 = sphi 0, %s137
      %s140 = sphi 0, %s139
      %s154 = sphi 0, %s140
      %s158 = sphi 0, %s158
      %s160 = sphi 0, %s158
      %s161 = sphi 0, %s160
      %s175 = sphi 0, %s161
      %s181 = sphi 0, %s183
      %s184 = sphi 0, %s181
      %s185 = sphi 0, %s184
      %s201 = sphi 0, %s185
    $region4: #{_lambda_.1} parent=1 // loop_header_branch
      %22 = sbr.rel (%p20) target = $region8
    $region5: #{_lambda_.1} parent=1 // loop_body
      %s24 = ssub.s32 %s19, 1
      %s25 = ssub.s32 %s19, 2
      %s26 = sadd.s32 %s19, 1
      %s27 = ssub.s32 %s19, %s26
      %p28 = scmp.eq.s32.totalorder %s27, 0
      %s30 = sadd.s32 %s29, 1
      %s31 = scalar_select %p28, %s29, %s30
      %p34 = pneg %p28
      %p35 = scmp.eq.s32.totalorder %s19, 1
      %p36 = por %p34, %p35
      %p37 = scmp.ne.s32.totalorder %s29, %s32
      %p38 = scmp.eq.s32.totalorder %s19, 0
      %p39 = por %p37, %p38
      %p40 = scmp.ne.s32.totalorder %s29, %s32
      %p41 = scmp.eq.s32.totalorder %s24, 1
      %p42 = por %p40, %p41
      %p43 = scmp.ne.s32.totalorder %s32, %s33
      %p44 = scmp.eq.s32.totalorder %s24, 0
      %p45 = por %p43, %p44
      %p46 = scmp.ne.s32.totalorder %s32, %s33
      %p47 = scmp.eq.s32.totalorder %s25, 1
      %p48 = por %p46, %p47
      %p50 = scmp.ne.s32.totalorder %s33, %s49
      %p51 = scmp.eq.s32.totalorder %s25, 0
      %p52 = por %p50, %p51
      %s54 = sadd.s32 %s53, 1
      %p57 = scmp.eq.s32.totalorder %s19, 1
      %p58 = scmp.ne.s32.totalorder %s53, %s55
      %p59 = scmp.eq.s32.totalorder %s19, 0
      %p60 = por %p58, %p59
      %p61 = scmp.ne.s32.totalorder %s53, %s55
      %p62 = scmp.eq.s32.totalorder %s24, 1
      %p63 = por %p61, %p62
      %p64 = scmp.ne.s32.totalorder %s55, %s56
      %p65 = scmp.eq.s32.totalorder %s24, 0
      %p66 = por %p64, %p65
      %p67 = scmp.ne.s32.totalorder %s55, %s56
      %p68 = scmp.eq.s32.totalorder %s25, 1
      %p69 = por %p67, %p68
      %p71 = scmp.ne.s32.totalorder %s56, %s70
      %p72 = scmp.eq.s32.totalorder %s25, 0
      %p73 = por %p71, %p72
      %s75 = sadd.s32 %s74, 1
      %p78 = scmp.eq.s32.totalorder %s19, 1
      %p79 = scmp.ne.s32.totalorder %s74, %s76
      %p80 = scmp.eq.s32.totalorder %s19, 0
      %p81 = por %p79, %p80
      %p82 = scmp.ne.s32.totalorder %s74, %s76
      %p83 = scmp.eq.s32.totalorder %s24, 1
      %p84 = por %p82, %p83
      %p85 = scmp.ne.s32.totalorder %s76, %s77
      %p86 = scmp.eq.s32.totalorder %s24, 0
      %p87 = por %p85, %p86
      %p88 = scmp.ne.s32.totalorder %s76, %s77
      %p89 = scmp.eq.s32.totalorder %s25, 1
      %p90 = por %p88, %p89
      %p92 = scmp.ne.s32.totalorder %s77, %s91
      %p93 = scmp.eq.s32.totalorder %s25, 0
      %p94 = por %p92, %p93
      %s96 = sadd.s32 %s95, 1
      %p99 = scmp.eq.s32.totalorder %s19, 1
      %p100 = scmp.ne.s32.totalorder %s95, %s97
      %p101 = scmp.eq.s32.totalorder %s19, 0
      %p102 = por %p100, %p101
      %p103 = scmp.ne.s32.totalorder %s95, %s97
      %p104 = scmp.eq.s32.totalorder %s24, 1
      %p105 = por %p103, %p104
      %p106 = scmp.ne.s32.totalorder %s97, %s98
      %p107 = scmp.eq.s32.totalorder %s24, 0
      %p108 = por %p106, %p107
      %p109 = scmp.ne.s32.totalorder %s97, %s98
      %p110 = scmp.eq.s32.totalorder %s25, 1
      %p111 = por %p109, %p110
      %p113 = scmp.ne.s32.totalorder %s98, %s112
      %p114 = scmp.eq.s32.totalorder %s25, 0
      %p115 = por %p113, %p114
      %s117 = sadd.s32 %s116, 1
      %p120 = scmp.eq.s32.totalorder %s19, 1
      %p121 = scmp.ne.s32.totalorder %s116, %s118
      %p122 = scmp.eq.s32.totalorder %s19, 0
      %p123 = por %p121, %p122
      %p124 = scmp.ne.s32.totalorder %s116, %s118
      %p125 = scmp.eq.s32.totalorder %s24, 1
      %p126 = por %p124, %p125
      %p127 = scmp.ne.s32.totalorder %s118, %s119
      %p128 = scmp.eq.s32.totalorder %s24, 0
      %p129 = por %p127, %p128
      %p130 = scmp.ne.s32.totalorder %s118, %s119
      %p131 = scmp.eq.s32.totalorder %s25, 1
      %p132 = por %p130, %p131
      %p134 = scmp.ne.s32.totalorder %s119, %s133
      %p135 = scmp.eq.s32.totalorder %s25, 0
      %p136 = por %p134, %p135
      %s138 = sadd.s32 %s137, 1
      %p141 = scmp.eq.s32.totalorder %s19, 1
      %p142 = scmp.ne.s32.totalorder %s137, %s139
      %p143 = scmp.eq.s32.totalorder %s19, 0
      %p144 = por %p142, %p143
      %p145 = scmp.ne.s32.totalorder %s137, %s139
      %p146 = scmp.eq.s32.totalorder %s24, 1
      %p147 = por %p145, %p146
      %p148 = scmp.ne.s32.totalorder %s139, %s140
      %p149 = scmp.eq.s32.totalorder %s24, 0
      %p150 = por %p148, %p149
      %p151 = scmp.ne.s32.totalorder %s139, %s140
      %p152 = scmp.eq.s32.totalorder %s25, 1
      %p153 = por %p151, %p152
      %p155 = scmp.ne.s32.totalorder %s140, %s154
      %p156 = scmp.eq.s32.totalorder %s25, 0
      %p157 = por %p155, %p156
      %s159 = sadd.s32 %s158, 1
      %p162 = scmp.eq.s32.totalorder %s19, 1
      %p163 = scmp.ne.s32.totalorder %s158, %s160
      %p164 = scmp.eq.s32.totalorder %s19, 0
      %p165 = por %p163, %p164
      %p166 = scmp.ne.s32.totalorder %s158, %s160
      %p167 = scmp.eq.s32.totalorder %s24, 1
      %p168 = por %p166, %p167
      %p169 = scmp.ne.s32.totalorder %s160, %s161
      %p170 = scmp.eq.s32.totalorder %s24, 0
      %p171 = por %p169, %p170
      %p172 = scmp.ne.s32.totalorder %s160, %s161
      %p173 = scmp.eq.s32.totalorder %s25, 1
      %p174 = por %p172, %p173
      %p176 = scmp.ne.s32.totalorder %s161, %s175
      %p177 = scmp.eq.s32.totalorder %s25, 0
      %p178 = por %p176, %p177
      %s179 = ssub.s32 %s19, %s26
      %p180 = scmp.eq.s32.totalorder %s179, 0
      %s182 = sadd.s32 %s181, 1
      %s183 = scalar_select %p180, %s181, %s182
      %p186 = pneg %p180
      %p187 = scmp.eq.s32.totalorder %s19, 1
      %p188 = por %p186, %p187
      %p189 = scmp.ne.s32.totalorder %s181, %s184
      %p190 = scmp.eq.s32.totalorder %s19, 0
      %p191 = por %p189, %p190
      %p192 = scmp.ne.s32.totalorder %s181, %s184
      %p193 = scmp.eq.s32.totalorder %s24, 1
      %p194 = por %p192, %p193
      %p195 = scmp.ne.s32.totalorder %s184, %s185
      %p196 = scmp.eq.s32.totalorder %s24, 0
      %p197 = por %p195, %p196
      %p198 = scmp.ne.s32.totalorder %s184, %s185
      %p199 = scmp.eq.s32.totalorder %s25, 1
      %p200 = por %p198, %p199
      %p202 = scmp.ne.s32.totalorder %s185, %s201
      %p203 = scmp.eq.s32.totalorder %s25, 0
      %p204 = por %p202, %p203
      %p205 = scmp.le.s32.totalorder 1, %s19
      %p206 = scmp.lt.s32.totalorder %s19, 3
      %p207 = pnand %p205, %p206
      %p208 = pneg %p207
      // Predicated region
      $region9: #{_lambda_.1} parent=5 // pred_check
        _
      $region10: #{_lambda_.1} parent=5 // pred_check_branch
        %210 = sbr.rel (%p207) target = $region12
      $region11: #{_lambda_.1} parent=5 // pred_region
        %s211 = ssub.s32 %s19, 1
        // Predicated region
        $region13: #{_lambda_.1} parent=11 // pred_check
          %p212 = pneg %p66
        $region14: #{_lambda_.1} parent=11 // pred_check_branch
          %214 = sbr.rel (%p212) target = $region16
        $region15: #{_lambda_.1} parent=11 // pred_region
          %s216 = ssub.s32 512, 512
          %217 = vsyncadd [#allocation5], %s216
          %s218 = sshll.u32 [#allocation4], 4
          %s219 = int_to_ptr.vmem [resolvable:$true] %s218
          %224 = dma.hbm_to_vmem [thread:$0]  %s1, 512, %s219, [#allocation5], 128, 128, 8
        $region16: #{_lambda_.1} parent=11 // pred_fallthru
          _
        // Predicated region
        $region17: #{_lambda_.1} parent=11 // pred_check
          %p225 = pneg %p87
        $region18: #{_lambda_.1} parent=11 // pred_check_branch
          %227 = sbr.rel (%p225) target = $region20
        $region19: #{_lambda_.1} parent=11 // pred_region
          _
        $region20: #{_lambda_.1} parent=11 // pred_fallthru
          _
        // Predicated region
        $region21: #{_lambda_.1} parent=11 // pred_check
          %p228 = pneg %p108
        $region22: #{_lambda_.1} parent=11 // pred_check_branch
          %230 = sbr.rel (%p228) target = $region24
        $region23: #{_lambda_.1} parent=11 // pred_region
          %s232 = ssub.s32 1024, 1024
          %233 = vsyncadd [#allocation5], %s232
          %s234 = sshll.u32 [#allocation6], 4
          %s235 = int_to_ptr.vmem [resolvable:$true] %s234
          %240 = dma.hbm_to_vmem [thread:$0]  %s3, 1024, %s235, [#allocation5], 128, 128, 8
        $region24: #{_lambda_.1} parent=11 // pred_fallthru
          _
        // Predicated region
        $region25: #{_lambda_.1} parent=11 // pred_check
          %p241 = pneg %p129
        $region26: #{_lambda_.1} parent=11 // pred_check_branch
          %243 = sbr.rel (%p241) target = $region28
        $region27: #{_lambda_.1} parent=11 // pred_region
          %s245 = ssub.s32 1024, 1024
          %246 = vsyncadd [#allocation8], %s245
          %s247 = sshll.u32 [#allocation7], 4
          %s248 = int_to_ptr.vmem [resolvable:$true] %s247
          %253 = dma.hbm_to_vmem [thread:$0]  %s4, 1024, %s248, [#allocation8], 128, 128, 8
        $region28: #{_lambda_.1} parent=11 // pred_fallthru
          _
        // Predicated region
        $region29: #{_lambda_.1} parent=11 // pred_check
          %p254 = pneg %p150
        $region30: #{_lambda_.1} parent=11 // pred_check_branch
          %256 = sbr.rel (%p254) target = $region32
        $region31: #{_lambda_.1} parent=11 // pred_region
          %s258 = ssub.s32 256, 256
          %259 = vsyncadd [#allocation8], %s258
          %s260 = sshll.u32 [#allocation9], 4
          %s261 = int_to_ptr.vmem [resolvable:$true] %s260
          %266 = dma.hbm_to_vmem [thread:$0]  %s5, 256, %s261, [#allocation8], 128, 128, 8
        $region32: #{_lambda_.1} parent=11 // pred_fallthru
          _
        // Predicated region
        $region33: #{_lambda_.1} parent=11 // pred_check
          %p267 = pneg %p171
        $region34: #{_lambda_.1} parent=11 // pred_check_branch
          %269 = sbr.rel (%p267) target = $region36
        $region35: #{_lambda_.1} parent=11 // pred_region
          %s271 = ssub.s32 256, 256
          %272 = vsyncadd [#allocation11], %s271
          %s273 = sshll.u32 [#allocation10], 4
          %s274 = int_to_ptr.vmem [resolvable:$true] %s273
          %279 = dma.hbm_to_vmem [thread:$0]  %s6, 256, %s274, [#allocation11], 128, 128, 8
        $region36: #{_lambda_.1} parent=11 // pred_fallthru
          _
      $region12: #{_lambda_.1} parent=5 // pred_fallthru
        _
      %p280 = scmp.lt.s32.totalorder %s19, 2
      // Predicated region
      $region37: #{_lambda_.1} parent=5 // pred_check
        %p281 = pneg %p280
      $region38: #{_lambda_.1} parent=5 // pred_check_branch
        %283 = sbr.rel (%p281) target = $region40
      $region39: #{_lambda_.1} parent=5 // pred_region
        // Predicated region
        $region41: #{_lambda_.1} parent=39 // pred_check
          %p284 = pneg %p39
        $region42: #{_lambda_.1} parent=39 // pred_check_branch
          %286 = sbr.rel (%p284) target = $region44
        $region43: #{_lambda_.1} parent=39 // pred_region
          %s287 = sand.u32 %s29, 1
          %s288 = scalar_lea.sflag [#allocation3], %s287
          %s289 = sand.u32 %s29, 1
          %s290 = scalar_lea.vmem [#allocation2], %s289
          %s292 = ssub.s32 16, 16
          %293 = vsyncadd %s288, %s292
          %s294 = smul.addr %s19, 16
          %s295 = scalar_lea.hbm %s0, %s294
          %s297 = sshll.u32 %s290, 4
          %s298 = int_to_ptr.vmem [resolvable:$true] %s297
          %300 = dma.hbm_to_vmem [thread:$0]  %s295, 16, %s298, %s288
        $region44: #{_lambda_.1} parent=39 // pred_fallthru
          _
      $region40: #{_lambda_.1} parent=5 // pred_fallthru
        _
      %p301 = scmp.le.s32.totalorder 1, %s19
      %p302 = scmp.lt.s32.totalorder %s19, 3
      %p303 = pnand %p301, %p302
      %p304 = pneg %p303
      // Predicated region
      $region45: #{_lambda_.1} parent=5 // pred_check
        _
      $region46: #{_lambda_.1} parent=5 // pred_check_branch
        %306 = sbr.rel (%p303) target = $region48
      $region47: #{_lambda_.1} parent=5 // pred_region
        %s307 = ssub.s32 %s19, 1
        %s308 = sand.u32 %s32, 1
        %s309 = scalar_lea.sflag [#allocation3], %s308
        %s310 = sand.u32 %s32, 1
        %s311 = scalar_lea.vmem [#allocation2], %s310
        // Predicated region
        $region49: #{_lambda_.1} parent=47 // pred_check
          %p312 = pneg %p45
        $region50: #{_lambda_.1} parent=47 // pred_check_branch
          %314 = sbr.rel (%p312) target = $region52
        $region51: #{_lambda_.1} parent=47 // pred_region
          %315 = dma.done %s309, 16
        $region52: #{_lambda_.1} parent=47 // pred_fallthru
          _
        // Predicated region
        $region53: #{_lambda_.1} parent=47 // pred_check
          %p316 = pneg %p66
        $region54: #{_lambda_.1} parent=47 // pred_check_branch
          %318 = sbr.rel (%p316) target = $region56
        $region55: #{_lambda_.1} parent=47 // pred_region
          %319 = dma.done [#allocation5], 512
        $region56: #{_lambda_.1} parent=47 // pred_fallthru
          _
        // Predicated region
        $region57: #{_lambda_.1} parent=47 // pred_check
          %p320 = pneg %p108
        $region58: #{_lambda_.1} parent=47 // pred_check_branch
          %322 = sbr.rel (%p320) target = $region60
        $region59: #{_lambda_.1} parent=47 // pred_region
          %323 = dma.done [#allocation5], 1024
        $region60: #{_lambda_.1} parent=47 // pred_fallthru
          _
        // Predicated region
        $region61: #{_lambda_.1} parent=47 // pred_check
          %p324 = pneg %p129
        $region62: #{_lambda_.1} parent=47 // pred_check_branch
          %326 = sbr.rel (%p324) target = $region64
        $region63: #{_lambda_.1} parent=47 // pred_region
          %327 = dma.done [#allocation8], 1024
        $region64: #{_lambda_.1} parent=47 // pred_fallthru
          _
        // Predicated region
        $region65: #{_lambda_.1} parent=47 // pred_check
          %p328 = pneg %p150
        $region66: #{_lambda_.1} parent=47 // pred_check_branch
          %330 = sbr.rel (%p328) target = $region68
        $region67: #{_lambda_.1} parent=47 // pred_region
          %331 = dma.done [#allocation8], 256
        $region68: #{_lambda_.1} parent=47 // pred_fallthru
          _
        // Predicated region
        $region69: #{_lambda_.1} parent=47 // pred_check
          %p332 = pneg %p171
        $region70: #{_lambda_.1} parent=47 // pred_check_branch
          %334 = sbr.rel (%p332) target = $region72
        $region71: #{_lambda_.1} parent=47 // pred_region
          %335 = dma.done [#allocation11], 256
        $region72: #{_lambda_.1} parent=47 // pred_fallthru
          _
        %s336 = sand.u32 %s32, 1
        %s337 = scalar_lea.sflag [#allocation3], %s336
        %s338 = sand.u32 %s32, 1
        %s339 = scalar_lea.vmem [#allocation2], %s338
        %p340 = pneg %p45
        %p341 = pneg %p42
        %p342 = pneg %p66
        %p343 = pneg %p63
        %p344 = pneg %p87
        %p345 = pneg %p84
        %p346 = pneg %p108
        %p347 = pneg %p105
        %p348 = pneg %p129
        %p349 = pneg %p126
        %p350 = pneg %p150
        %p351 = pneg %p147
        %p352 = pneg %p171
        %p353 = pneg %p168
        %p354 = pneg %p197
        %p355 = pneg %p194
        %p356 = scmp.lt.s32.totalorder %s24, 1
        %s357 = scalar_select %p356, %s24, 1
        %s358 = smul.addr %s357, 6
        %s359 = smul.addr %s358, 8
        %s360 = scalar_lea.vmem %s7, %s359
        %p361 = scmp.lt.s32.totalorder %s24, 1
        %s362 = scalar_select %p361, %s24, 1
        %s363 = smul.addr %s362, 6
        %s364 = smul.addr %s363, 8
        %s365 = scalar_lea.vmem %s7, %s364
        %v366 = vld [vmem:[%s311] sm:$0x1]
        %v367 = vld [vmem:[#allocation4] sm:$0xff]
        %v368 = vld [vmem:[#allocation4 + $0x8] sm:$0xff]
        %v369 = vld [vmem:[#allocation4 + $0x10] sm:$0xff]
        %v370 = vld [vmem:[#allocation4 + $0x18] sm:$0xff]
        %v371 = vld [vmem:[%s2] sm:$0x1]
        %vm372 = vcmask 261120
        %v374 = vsel %vm372, %v366, 0
        %376 = vmatprep.subr.mxu0 0.0
        %377 = vmatpush1.msra.mxu0 0.0
        %378 = vmatprep.subr.mxu0 0.0
        %379 = vmatpush1.msra.mxu0 0.0
        %380 = vmatprep.subr.mxu0 0.0
        %381 = vmatpush1.msra.mxu0 0.0
        %382 = vmatprep.subr.mxu0 0.0
        %383 = vmatpush1.msra.mxu0 0.0
        %384 = vmatprep.subr.mxu0 0.0
        %385 = vmatpush1.msra.mxu0 0.0
        %386 = vmatprep.subr.mxu0 0.0
        %387 = vmatpush1.msra.mxu0 0.0
        %388 = vmatprep.subr.mxu0 0.0
        %389 = vmatpush1.msra.mxu0 0.0
        %390 = vmatprep.subr.mxu0 0.0
        %391 = vmatpush1.msra.mxu0 0.0
        %392 = vmatprep.subr.mxu0 0.0
        %393 = vmatpush1.msra.mxu0 0.0
        %394 = vmatprep.subr.mxu0 0.0
        %395 = vmatpush1.msra.mxu0 0.0
        %396 = vmatprep.subr.mxu0 0.0
        %397 = vmatpush1.msra.mxu0 0.0
        %398 = vmatprep.subr.mxu0 0.0
        %399 = vmatpush1.msra.mxu0 0.0
        %400 = vmatprep.subr.mxu0 0.0
        %401 = vmatpush1.msra.mxu0 %v370
        %402 = vmatprep.subr.mxu0 0.0
        %403 = vmatpush1.msra.mxu0 %v369
        %404 = vmatprep.subr.mxu0 0.0
        %405 = vmatpush1.msra.mxu0 %v368
        %406 = vmatprep.subr.mxu0 0.0
        %407 = vmatpush1.msra.mxu0 %v367
        %408 = vmatprep.subr.mxu0 0.0
        %409 = vmatpush2.msra.mxu0 0.0
        %410 = vmatprep.subr.mxu0 0.0
        %411 = vmatpush2.msra.mxu0 0.0
        %412 = vmatprep.subr.mxu0 0.0
        %413 = vmatpush2.msra.mxu0 0.0
        %414 = vmatprep.subr.mxu0 0.0
        %415 = vmatpush2.msra.mxu0 0.0
        %416 = vmatprep.subr.mxu0 0.0
        %417 = vmatpush2.msra.mxu0 0.0
        %418 = vmatprep.subr.mxu0 0.0
        %419 = vmatpush2.msra.mxu0 0.0
        %420 = vmatprep.subr.mxu0 0.0
        %421 = vmatpush2.msra.mxu0 0.0
        %422 = vmatprep.subr.mxu0 0.0
        %423 = vmatpush2.msra.mxu0 0.0
        %424 = vmatprep.subr.mxu0 0.0
        %425 = vmatpush2.msra.mxu0 0.0
        %426 = vmatprep.subr.mxu0 0.0
        %427 = vmatpush2.msra.mxu0 0.0
        %428 = vmatprep.subr.mxu0 0.0
        %429 = vmatpush2.msra.mxu0 0.0
        %430 = vmatprep.subr.mxu0 0.0
        %431 = vmatpush2.msra.mxu0 0.0
        %432 = vmatprep.subr.mxu0 0.0
        %433 = vmatpush2.msra.mxu0 0.0
        %434 = vmatprep.subr.mxu0 0.0
        %435 = vmatpush2.msra.mxu0 0.0
        %436 = vmatprep.subr.mxu0 0.0
        %437 = vmatpush2.msra.mxu0 0.0
        %438 = vmatprep.subr.mxu0 0.0
        %439 = vmatpush2.msra.mxu0 0.0
        %440 = vmatprep.mubr.f32.mxu0 0.0
        %441 = vmatmul.mubr.f32.gmra.mxu0 %v374
        %v442 = vpop.f32.mrf.mxu0
        %v443 = vadd.f32 %v371, %v442
        %v444 = vpop.f32.mrf.mxu0
        %445 = vdwg.mxu0
        %v446 = vmax.f32 %v443, 0.0
        %v447 = vld [vmem:[#allocation6] sm:$0xff]
        %v448 = vld [vmem:[#allocation6 + $0x8] sm:$0xff]
        %v449 = vld [vmem:[#allocation6 + $0x10] sm:$0xff]
        %v450 = vld [vmem:[#allocation6 + $0x18] sm:$0xff]
        %v451 = vld [vmem:[#allocation6 + $0x20] sm:$0xff]
        %v452 = vld [vmem:[#allocation6 + $0x28] sm:$0xff]
        %v453 = vld [vmem:[#allocation6 + $0x30] sm:$0xff]
        %v454 = vld [vmem:[#allocation6 + $0x38] sm:$0xff]
        %v455 = vld [vmem:[#allocation7] sm:$0xff]
        %v456 = vld [vmem:[#allocation7 + $0x8] sm:$0xff]
        %v457 = vld [vmem:[#allocation7 + $0x10] sm:$0xff]
        %v458 = vld [vmem:[#allocation7 + $0x18] sm:$0xff]
        %v459 = vld [vmem:[#allocation7 + $0x20] sm:$0xff]
        %v460 = vld [vmem:[#allocation7 + $0x28] sm:$0xff]
        %v461 = vld [vmem:[#allocation7 + $0x30] sm:$0xff]
        %v462 = vld [vmem:[#allocation7 + $0x38] sm:$0xff]
        %464 = vset.pattern.permute.xlu0 0
        %465 = vperm.xlu0 %464, %v455
        %v466 = vpop.permute.xlu0 %465
        %469 = vset.pattern.permute.xlu0 0
        %470 = vperm.xlu0 %469, %v456
        %v471 = vpop.permute.xlu0 %470
        %474 = vset.pattern.permute.xlu0 0
        %475 = vperm.xlu0 %474, %v457
        %v476 = vpop.permute.xlu0 %475
        %479 = vset.pattern.permute.xlu0 0
        %480 = vperm.xlu0 %479, %v458
        %v481 = vpop.permute.xlu0 %480
        %484 = vset.pattern.permute.xlu0 0
        %485 = vperm.xlu0 %484, %v459
        %v486 = vpop.permute.xlu0 %485
        %489 = vset.pattern.permute.xlu0 0
        %490 = vperm.xlu0 %489, %v460
        %v491 = vpop.permute.xlu0 %490
        %494 = vset.pattern.permute.xlu0 0
        %495 = vperm.xlu0 %494, %v461
        %v496 = vpop.permute.xlu0 %495
        %499 = vset.pattern.permute.xlu0 0
        %500 = vperm.xlu0 %499, %v462
        %v501 = vpop.permute.xlu0 %500
        %v503 = vadd.f32 %v466, 0.0
        %v504 = vadd.f32 %v471, 0.0
        %v505 = vadd.f32 %v476, 0.0
        %v506 = vadd.f32 %v481, 0.0
        %v507 = vadd.f32 %v486, 0.0
        %v508 = vadd.f32 %v491, 0.0
        %v509 = vadd.f32 %v496, 0.0
        %v510 = vadd.f32 %v501, 0.0
        %512 = vset.pattern.permute.xlu0 0
        %513 = vperm.xlu0 %512, %v447
        %v514 = vpop.permute.xlu0 %513
        %517 = vset.pattern.permute.xlu0 0
        %518 = vperm.xlu0 %517, %v448
        %v519 = vpop.permute.xlu0 %518
        %522 = vset.pattern.permute.xlu0 0
        %523 = vperm.xlu0 %522, %v449
        %v524 = vpop.permute.xlu0 %523
        %527 = vset.pattern.permute.xlu0 0
        %528 = vperm.xlu0 %527, %v450
        %v529 = vpop.permute.xlu0 %528
        %532 = vset.pattern.permute.xlu0 0
        %533 = vperm.xlu0 %532, %v451
        %v534 = vpop.permute.xlu0 %533
        %537 = vset.pattern.permute.xlu0 0
        %538 = vperm.xlu0 %537, %v452
        %v539 = vpop.permute.xlu0 %538
        %542 = vset.pattern.permute.xlu0 0
        %543 = vperm.xlu0 %542, %v453
        %v544 = vpop.permute.xlu0 %543
        %547 = vset.pattern.permute.xlu0 0
        %548 = vperm.xlu0 %547, %v454
        %v549 = vpop.permute.xlu0 %548
        %v551 = vlaneseq
        %v552 = vshrl.u32 %v551, 7
        %v553 = vsub.s32 0, %v552
        %v554 = vrot.slane %v446, %v553
        %v555 = vmul.f32 %v514, %v554
        %v556 = vmul.f32 %v519, %v554
        %v557 = vmul.f32 %v524, %v554
        %v558 = vmul.f32 %v529, %v554
        %v559 = vmul.f32 %v534, %v554
        %v560 = vmul.f32 %v539, %v554
        %v561 = vmul.f32 %v544, %v554
        %v562 = vmul.f32 %v549, %v554
        %v563 = vadd.f32 %v503, %v555
        %v564 = vadd.f32 %v504, %v556
        %v565 = vadd.f32 %v505, %v557
        %v566 = vadd.f32 %v506, %v558
        %v567 = vadd.f32 %v507, %v559
        %v568 = vadd.f32 %v508, %v560
        %v569 = vadd.f32 %v509, %v561
        %v570 = vadd.f32 %v510, %v562
        %571 = vset.pattern.permute.xlu0 1
        %572 = vperm.xlu0 %571, %v447
        %v573 = vpop.permute.xlu0 %572
        %575 = vset.pattern.permute.xlu0 1
        %576 = vperm.xlu0 %575, %v448
        %v577 = vpop.permute.xlu0 %576
        %579 = vset.pattern.permute.xlu0 1
        %580 = vperm.xlu0 %579, %v449
        %v581 = vpop.permute.xlu0 %580
        %583 = vset.pattern.permute.xlu0 1
        %584 = vperm.xlu0 %583, %v450
        %v585 = vpop.permute.xlu0 %584
        %587 = vset.pattern.permute.xlu0 1
        %588 = vperm.xlu0 %587, %v451
        %v589 = vpop.permute.xlu0 %588
        %591 = vset.pattern.permute.xlu0 1
        %592 = vperm.xlu0 %591, %v452
        %v593 = vpop.permute.xlu0 %592
        %595 = vset.pattern.permute.xlu0 1
        %596 = vperm.xlu0 %595, %v453
        %v597 = vpop.permute.xlu0 %596
        %599 = vset.pattern.permute.xlu0 1
        %600 = vperm.xlu0 %599, %v454
        %v601 = vpop.permute.xlu0 %600
        %v603 = vmul.f32 %v573, %v554
        %v604 = vmul.f32 %v577, %v554
        %v605 = vmul.f32 %v581, %v554
        %v606 = vmul.f32 %v585, %v554
        %v607 = vmul.f32 %v589, %v554
        %v608 = vmul.f32 %v593, %v554
        %v609 = vmul.f32 %v597, %v554
        %v610 = vmul.f32 %v601, %v554
        %619 = vrot.lane.b32.xlu0 %v603, 112
        %v620 = vpop.permute.xlu0 %619
        %621 = vrot.lane.b32.xlu0 %v604, 112
        %v622 = vpop.permute.xlu0 %621
        %623 = vrot.lane.b32.xlu0 %v605, 112
        %v624 = vpop.permute.xlu0 %623
        %625 = vrot.lane.b32.xlu0 %v606, 112
        %v626 = vpop.permute.xlu0 %625
        %627 = vrot.lane.b32.xlu0 %v607, 112
        %v628 = vpop.permute.xlu0 %627
        %629 = vrot.lane.b32.xlu0 %v608, 112
        %v630 = vpop.permute.xlu0 %629
        %631 = vrot.lane.b32.xlu0 %v609, 112
        %v632 = vpop.permute.xlu0 %631
        %633 = vrot.lane.b32.xlu0 %v610, 112
        %v634 = vpop.permute.xlu0 %633
        %v643 = vadd.f32 %v563, %v620
        %v644 = vadd.f32 %v564, %v622
        %v645 = vadd.f32 %v565, %v624
        %v646 = vadd.f32 %v566, %v626
        %v647 = vadd.f32 %v567, %v628
        %v648 = vadd.f32 %v568, %v630
        %v649 = vadd.f32 %v569, %v632
        %v650 = vadd.f32 %v570, %v634
        %651 = vset.pattern.permute.xlu0 2
        %652 = vperm.xlu0 %651, %v447
        %v653 = vpop.permute.xlu0 %652
        %655 = vset.pattern.permute.xlu0 2
        %656 = vperm.xlu0 %655, %v448
        %v657 = vpop.permute.xlu0 %656
        %659 = vset.pattern.permute.xlu0 2
        %660 = vperm.xlu0 %659, %v449
        %v661 = vpop.permute.xlu0 %660
        %663 = vset.pattern.permute.xlu0 2
        %664 = vperm.xlu0 %663, %v450
        %v665 = vpop.permute.xlu0 %664
        %667 = vset.pattern.permute.xlu0 2
        %668 = vperm.xlu0 %667, %v451
        %v669 = vpop.permute.xlu0 %668
        %671 = vset.pattern.permute.xlu0 2
        %672 = vperm.xlu0 %671, %v452
        %v673 = vpop.permute.xlu0 %672
        %675 = vset.pattern.permute.xlu0 2
        %676 = vperm.xlu0 %675, %v453
        %v677 = vpop.permute.xlu0 %676
        %679 = vset.pattern.permute.xlu0 2
        %680 = vperm.xlu0 %679, %v454
        %v681 = vpop.permute.xlu0 %680
        %v683 = vmul.f32 %v653, %v554
        %v684 = vmul.f32 %v657, %v554
        %v685 = vmul.f32 %v661, %v554
        %v686 = vmul.f32 %v665, %v554
        %v687 = vmul.f32 %v669, %v554
        %v688 = vmul.f32 %v673, %v554
        %v689 = vmul.f32 %v677, %v554
        %v690 = vmul.f32 %v681, %v554
        %699 = vrot.lane.b32.xlu0 %v683, 96
        %v700 = vpop.permute.xlu0 %699
        %701 = vrot.lane.b32.xlu0 %v684, 96
        %v702 = vpop.permute.xlu0 %701
        %703 = vrot.lane.b32.xlu0 %v685, 96
        %v704 = vpop.permute.xlu0 %703
        %705 = vrot.lane.b32.xlu0 %v686, 96
        %v706 = vpop.permute.xlu0 %705
        %707 = vrot.lane.b32.xlu0 %v687, 96
        %v708 = vpop.permute.xlu0 %707
        %709 = vrot.lane.b32.xlu0 %v688, 96
        %v710 = vpop.permute.xlu0 %709
        %711 = vrot.lane.b32.xlu0 %v689, 96
        %v712 = vpop.permute.xlu0 %711
        %713 = vrot.lane.b32.xlu0 %v690, 96
        %v714 = vpop.permute.xlu0 %713
        %v723 = vadd.f32 %v643, %v700
        %v724 = vadd.f32 %v644, %v702
        %v725 = vadd.f32 %v645, %v704
        %v726 = vadd.f32 %v646, %v706
        %v727 = vadd.f32 %v647, %v708
        %v728 = vadd.f32 %v648, %v710
        %v729 = vadd.f32 %v649, %v712
        %v730 = vadd.f32 %v650, %v714
        %731 = vset.pattern.permute.xlu0 3
        %732 = vperm.xlu0 %731, %v447
        %v733 = vpop.permute.xlu0 %732
        %735 = vset.pattern.permute.xlu0 3
        %736 = vperm.xlu0 %735, %v448
        %v737 = vpop.permute.xlu0 %736
        %739 = vset.pattern.permute.xlu0 3
        %740 = vperm.xlu0 %739, %v449
        %v741 = vpop.permute.xlu0 %740
        %743 = vset.pattern.permute.xlu0 3
        %744 = vperm.xlu0 %743, %v450
        %v745 = vpop.permute.xlu0 %744
        %747 = vset.pattern.permute.xlu0 3
        %748 = vperm.xlu0 %747, %v451
        %v749 = vpop.permute.xlu0 %748
        %751 = vset.pattern.permute.xlu0 3
        %752 = vperm.xlu0 %751, %v452
        %v753 = vpop.permute.xlu0 %752
        %755 = vset.pattern.permute.xlu0 3
        %756 = vperm.xlu0 %755, %v453
        %v757 = vpop.permute.xlu0 %756
        %759 = vset.pattern.permute.xlu0 3
        %760 = vperm.xlu0 %759, %v454
        %v761 = vpop.permute.xlu0 %760
        %v763 = vmul.f32 %v733, %v554
        %v764 = vmul.f32 %v737, %v554
        %v765 = vmul.f32 %v741, %v554
        %v766 = vmul.f32 %v745, %v554
        %v767 = vmul.f32 %v749, %v554
        %v768 = vmul.f32 %v753, %v554
        %v769 = vmul.f32 %v757, %v554
        %v770 = vmul.f32 %v761, %v554
        %779 = vrot.lane.b32.xlu0 %v763, 80
        %v780 = vpop.permute.xlu0 %779
        %781 = vrot.lane.b32.xlu0 %v764, 80
        %v782 = vpop.permute.xlu0 %781
        %783 = vrot.lane.b32.xlu0 %v765, 80
        %v784 = vpop.permute.xlu0 %783
        %785 = vrot.lane.b32.xlu0 %v766, 80
        %v786 = vpop.permute.xlu0 %785
        %787 = vrot.lane.b32.xlu0 %v767, 80
        %v788 = vpop.permute.xlu0 %787
        %789 = vrot.lane.b32.xlu0 %v768, 80
        %v790 = vpop.permute.xlu0 %789
        %791 = vrot.lane.b32.xlu0 %v769, 80
        %v792 = vpop.permute.xlu0 %791
        %793 = vrot.lane.b32.xlu0 %v770, 80
        %v794 = vpop.permute.xlu0 %793
        %v803 = vadd.f32 %v723, %v780
        %v804 = vadd.f32 %v724, %v782
        %v805 = vadd.f32 %v725, %v784
        %v806 = vadd.f32 %v726, %v786
        %v807 = vadd.f32 %v727, %v788
        %v808 = vadd.f32 %v728, %v790
        %v809 = vadd.f32 %v729, %v792
        %v810 = vadd.f32 %v730, %v794
        %v811 = vmax.f32 %v803, 0.0
        %v812 = vmax.f32 %v804, 0.0
        %v813 = vmax.f32 %v805, 0.0
        %v814 = vmax.f32 %v806, 0.0
        %v815 = vmax.f32 %v807, 0.0
        %v816 = vmax.f32 %v808, 0.0
        %v817 = vmax.f32 %v809, 0.0
        %v818 = vmax.f32 %v810, 0.0
        %v819 = vld [vmem:[#allocation9] sm:$0xff]
        %v820 = vld [vmem:[#allocation9 + $0x8] sm:$0xf]
        %v821 = vld [vmem:[#allocation10] sm:$0xff]
        %v822 = vld [vmem:[#allocation10 + $0x8] sm:$0xf]
        %824 = vset.pattern.permute.xlu0 0
        %825 = vperm.xlu0 %824, %v821
        %v826 = vpop.permute.xlu0 %825
        %829 = vset.pattern.permute.xlu0 0
        %830 = vperm.xlu0 %829, %v822
        %v831 = vpop.permute.xlu0 %830
        %v833 = vadd.f32 %v826, 0.0
        %v834 = vadd.f32 %v831, 0.0
        %836 = vset.pattern.permute.xlu0 0
        %837 = vperm.xlu0 %836, %v819
        %v838 = vpop.permute.xlu0 %837
        %841 = vset.pattern.permute.xlu0 0
        %842 = vperm.xlu0 %841, %v820
        %v843 = vpop.permute.xlu0 %842
        %v845 = vlaneseq
        %v846 = vshrl.u32 %v845, 7
        %v847 = vsub.s32 0, %v846
        %v848 = vrot.slane %v811, %v847
        %v849 = vmul.f32 %v838, %v848
        %v850 = vmul.f32 %v843, %v848
        %v851 = vadd.f32 %v833, %v849
        %v852 = vadd.f32 %v834, %v850
        %853 = vset.pattern.permute.xlu0 1
        %854 = vperm.xlu0 %853, %v819
        %v855 = vpop.permute.xlu0 %854
        %857 = vset.pattern.permute.xlu0 1
        %858 = vperm.xlu0 %857, %v820
        %v859 = vpop.permute.xlu0 %858
        %v861 = vlaneseq
        %v862 = vshrl.u32 %v861, 7
        %v863 = vsub.s32 1, %v862
        %v864 = vrot.slane %v811, %v863
        %v865 = vmul.f32 %v855, %v864
        %v866 = vmul.f32 %v859, %v864
        %v867 = vadd.f32 %v851, %v865
        %v868 = vadd.f32 %v852, %v866
        %869 = vset.pattern.permute.xlu0 2
        %870 = vperm.xlu0 %869, %v819
        %v871 = vpop.permute.xlu0 %870
        %873 = vset.pattern.permute.xlu0 2
        %874 = vperm.xlu0 %873, %v820
        %v875 = vpop.permute.xlu0 %874
        %v877 = vlaneseq
        %v878 = vshrl.u32 %v877, 7
        %v879 = vsub.s32 2, %v878
        %v880 = vrot.slane %v811, %v879
        %v881 = vmul.f32 %v871, %v880
        %v882 = vmul.f32 %v875, %v880
        %v883 = vadd.f32 %v867, %v881
        %v884 = vadd.f32 %v868, %v882
        %885 = vset.pattern.permute.xlu0 3
        %886 = vperm.xlu0 %885, %v819
        %v887 = vpop.permute.xlu0 %886
        %889 = vset.pattern.permute.xlu0 3
        %890 = vperm.xlu0 %889, %v820
        %v891 = vpop.permute.xlu0 %890
        %v893 = vlaneseq
        %v894 = vshrl.u32 %v893, 7
        %v895 = vsub.s32 3, %v894
        %v896 = vrot.slane %v811, %v895
        %v897 = vmul.f32 %v887, %v896
        %v898 = vmul.f32 %v891, %v896
        %v899 = vadd.f32 %v883, %v897
        %v900 = vadd.f32 %v884, %v898
        %901 = vset.pattern.permute.xlu0 4
        %902 = vperm.xlu0 %901, %v819
        %v903 = vpop.permute.xlu0 %902
        %905 = vset.pattern.permute.xlu0 4
        %906 = vperm.xlu0 %905, %v820
        %v907 = vpop.permute.xlu0 %906
        %v909 = vlaneseq
        %v910 = vshrl.u32 %v909, 7
        %v911 = vsub.s32 4, %v910
        %v912 = vrot.slane %v811, %v911
        %v913 = vmul.f32 %v903, %v912
        %v914 = vmul.f32 %v907, %v912
        %v915 = vadd.f32 %v899, %v913
        %v916 = vadd.f32 %v900, %v914
        %917 = vset.pattern.permute.xlu0 5
        %918 = vperm.xlu0 %917, %v819
        %v919 = vpop.permute.xlu0 %918
        %921 = vset.pattern.permute.xlu0 5
        %922 = vperm.xlu0 %921, %v820
        %v923 = vpop.permute.xlu0 %922
        %v925 = vlaneseq
        %v926 = vshrl.u32 %v925, 7
        %v927 = vsub.s32 5, %v926
        %v928 = vrot.slane %v811, %v927
        %v929 = vmul.f32 %v919, %v928
        %v930 = vmul.f32 %v923, %v928
        %v931 = vadd.f32 %v915, %v929
        %v932 = vadd.f32 %v916, %v930
        %933 = vset.pattern.permute.xlu0 6
        %934 = vperm.xlu0 %933, %v819
        %v935 = vpop.permute.xlu0 %934
        %937 = vset.pattern.permute.xlu0 6
        %938 = vperm.xlu0 %937, %v820
        %v939 = vpop.permute.xlu0 %938
        %v941 = vlaneseq
        %v942 = vshrl.u32 %v941, 7
        %v943 = vsub.s32 6, %v942
        %v944 = vrot.slane %v811, %v943
        %v945 = vmul.f32 %v935, %v944
        %v946 = vmul.f32 %v939, %v944
        %v947 = vadd.f32 %v931, %v945
        %v948 = vadd.f32 %v932, %v946
        %949 = vset.pattern.permute.xlu0 7
        %950 = vperm.xlu0 %949, %v819
        %v951 = vpop.permute.xlu0 %950
        %953 = vset.pattern.permute.xlu0 7
        %954 = vperm.xlu0 %953, %v820
        %v955 = vpop.permute.xlu0 %954
        %v957 = vlaneseq
        %v958 = vshrl.u32 %v957, 7
        %v959 = vsub.s32 7, %v958
        %v960 = vrot.slane %v811, %v959
        %v961 = vmul.f32 %v951, %v960
        %v962 = vmul.f32 %v955, %v960
        %v963 = vadd.f32 %v947, %v961
        %v964 = vadd.f32 %v948, %v962
        %965 = vset.pattern.permute.xlu0 8
        %966 = vperm.xlu0 %965, %v819
        %v967 = vpop.permute.xlu0 %966
        %969 = vset.pattern.permute.xlu0 8
        %970 = vperm.xlu0 %969, %v820
        %v971 = vpop.permute.xlu0 %970
        %v973 = vlaneseq
        %v974 = vshrl.u32 %v973, 7
        %v975 = vsub.s32 0, %v974
        %v976 = vrot.slane %v812, %v975
        %v977 = vmul.f32 %v967, %v976
        %v978 = vmul.f32 %v971, %v976
        %v979 = vadd.f32 %v963, %v977
        %v980 = vadd.f32 %v964, %v978
        %981 = vset.pattern.permute.xlu0 9
        %982 = vperm.xlu0 %981, %v819
        %v983 = vpop.permute.xlu0 %982
        %985 = vset.pattern.permute.xlu0 9
        %986 = vperm.xlu0 %985, %v820
        %v987 = vpop.permute.xlu0 %986
        %v989 = vlaneseq
        %v990 = vshrl.u32 %v989, 7
        %v991 = vsub.s32 1, %v990
        %v992 = vrot.slane %v812, %v991
        %v993 = vmul.f32 %v983, %v992
        %v994 = vmul.f32 %v987, %v992
        %v995 = vadd.f32 %v979, %v993
        %v996 = vadd.f32 %v980, %v994
        %997 = vset.pattern.permute.xlu0 10
        %998 = vperm.xlu0 %997, %v819
        %v999 = vpop.permute.xlu0 %998
        %1001 = vset.pattern.permute.xlu0 10
        %1002 = vperm.xlu0 %1001, %v820
        %v1003 = vpop.permute.xlu0 %1002
        %v1005 = vlaneseq
        %v1006 = vshrl.u32 %v1005, 7
        %v1007 = vsub.s32 2, %v1006
        %v1008 = vrot.slane %v812, %v1007
        %v1009 = vmul.f32 %v999, %v1008
        %v1010 = vmul.f32 %v1003, %v1008
        %v1011 = vadd.f32 %v995, %v1009
        %v1012 = vadd.f32 %v996, %v1010
        %1013 = vset.pattern.permute.xlu0 11
        %1014 = vperm.xlu0 %1013, %v819
        %v1015 = vpop.permute.xlu0 %1014
        %1017 = vset.pattern.permute.xlu0 11
        %1018 = vperm.xlu0 %1017, %v820
        %v1019 = vpop.permute.xlu0 %1018
        %v1021 = vlaneseq
        %v1022 = vshrl.u32 %v1021, 7
        %v1023 = vsub.s32 3, %v1022
        %v1024 = vrot.slane %v812, %v1023
        %v1025 = vmul.f32 %v1015, %v1024
        %v1026 = vmul.f32 %v1019, %v1024
        %v1027 = vadd.f32 %v1011, %v1025
        %v1028 = vadd.f32 %v1012, %v1026
        %1029 = vset.pattern.permute.xlu0 12
        %1030 = vperm.xlu0 %1029, %v819
        %v1031 = vpop.permute.xlu0 %1030
        %1033 = vset.pattern.permute.xlu0 12
        %1034 = vperm.xlu0 %1033, %v820
        %v1035 = vpop.permute.xlu0 %1034
        %v1037 = vlaneseq
        %v1038 = vshrl.u32 %v1037, 7
        %v1039 = vsub.s32 4, %v1038
        %v1040 = vrot.slane %v812, %v1039
        %v1041 = vmul.f32 %v1031, %v1040
        %v1042 = vmul.f32 %v1035, %v1040
        %v1043 = vadd.f32 %v1027, %v1041
        %v1044 = vadd.f32 %v1028, %v1042
        %1045 = vset.pattern.permute.xlu0 13
        %1046 = vperm.xlu0 %1045, %v819
        %v1047 = vpop.permute.xlu0 %1046
        %1049 = vset.pattern.permute.xlu0 13
        %1050 = vperm.xlu0 %1049, %v820
        %v1051 = vpop.permute.xlu0 %1050
        %v1053 = vlaneseq
        %v1054 = vshrl.u32 %v1053, 7
        %v1055 = vsub.s32 5, %v1054
        %v1056 = vrot.slane %v812, %v1055
        %v1057 = vmul.f32 %v1047, %v1056
        %v1058 = vmul.f32 %v1051, %v1056
        %v1059 = vadd.f32 %v1043, %v1057
        %v1060 = vadd.f32 %v1044, %v1058
        %1061 = vset.pattern.permute.xlu0 14
        %1062 = vperm.xlu0 %1061, %v819
        %v1063 = vpop.permute.xlu0 %1062
        %1065 = vset.pattern.permute.xlu0 14
        %1066 = vperm.xlu0 %1065, %v820
        %v1067 = vpop.permute.xlu0 %1066
        %v1069 = vlaneseq
        %v1070 = vshrl.u32 %v1069, 7
        %v1071 = vsub.s32 6, %v1070
        %v1072 = vrot.slane %v812, %v1071
        %v1073 = vmul.f32 %v1063, %v1072
        %v1074 = vmul.f32 %v1067, %v1072
        %v1075 = vadd.f32 %v1059, %v1073
        %v1076 = vadd.f32 %v1060, %v1074
        %1077 = vset.pattern.permute.xlu0 15
        %1078 = vperm.xlu0 %1077, %v819
        %v1079 = vpop.permute.xlu0 %1078
        %1081 = vset.pattern.permute.xlu0 15
        %1082 = vperm.xlu0 %1081, %v820
        %v1083 = vpop.permute.xlu0 %1082
        %v1085 = vlaneseq
        %v1086 = vshrl.u32 %v1085, 7
        %v1087 = vsub.s32 7, %v1086
        %v1088 = vrot.slane %v812, %v1087
        %v1089 = vmul.f32 %v1079, %v1088
        %v1090 = vmul.f32 %v1083, %v1088
        %v1091 = vadd.f32 %v1075, %v1089
        %v1092 = vadd.f32 %v1076, %v1090
        %v1093 = vxor.u32 %v1091, 2147483648
        %v1094 = vxor.u32 %v1092, 2147483648
        %v1095 = vmul.f32 %v1093, 1.442695
        %v1096 = vpow.pop %v1095
        %v1097 = vmul.f32 %v1094, 1.442695
        %v1098 = vpow.pop %v1097
        %v1099 = vadd.f32 %v1096, 1.0
        %v1100 = vadd.f32 %v1098, 1.0
        %v1101 = vrcp.pop %v1099
        %v1102 = vmul.f32 1.0, %v1101
        %v1103 = vrcp.pop %v1100
        %v1104 = vmul.f32 1.0, %v1103
        %v1105 = vlaneseq
        %v1106 = vshrl.u32 %v1105, 7
        %v1107 = vsub.s32 0, %v1106
        %v1108 = vrot.slane %v813, %v1107
        %v1109 = vmul.f32 %v838, %v1108
        %v1110 = vmul.f32 %v843, %v1108
        %v1111 = vadd.f32 %v833, %v1109
        %v1112 = vadd.f32 %v834, %v1110
        %v1113 = vlaneseq
        %v1114 = vshrl.u32 %v1113, 7
        %v1115 = vsub.s32 1, %v1114
        %v1116 = vrot.slane %v813, %v1115
        %v1117 = vmul.f32 %v855, %v1116
        %v1118 = vmul.f32 %v859, %v1116
        %v1119 = vadd.f32 %v1111, %v1117
        %v1120 = vadd.f32 %v1112, %v1118
        %v1121 = vlaneseq
        %v1122 = vshrl.u32 %v1121, 7
        %v1123 = vsub.s32 2, %v1122
        %v1124 = vrot.slane %v813, %v1123
        %v1125 = vmul.f32 %v871, %v1124
        %v1126 = vmul.f32 %v875, %v1124
        %v1127 = vadd.f32 %v1119, %v1125
        %v1128 = vadd.f32 %v1120, %v1126
        %v1129 = vlaneseq
        %v1130 = vshrl.u32 %v1129, 7
        %v1131 = vsub.s32 3, %v1130
        %v1132 = vrot.slane %v813, %v1131
        %v1133 = vmul.f32 %v887, %v1132
        %v1134 = vmul.f32 %v891, %v1132
        %v1135 = vadd.f32 %v1127, %v1133
        %v1136 = vadd.f32 %v1128, %v1134
        %v1137 = vlaneseq
        %v1138 = vshrl.u32 %v1137, 7
        %v1139 = vsub.s32 4, %v1138
        %v1140 = vrot.slane %v813, %v1139
        %v1141 = vmul.f32 %v903, %v1140
        %v1142 = vmul.f32 %v907, %v1140
        %v1143 = vadd.f32 %v1135, %v1141
        %v1144 = vadd.f32 %v1136, %v1142
        %v1145 = vlaneseq
        %v1146 = vshrl.u32 %v1145, 7
        %v1147 = vsub.s32 5, %v1146
        %v1148 = vrot.slane %v813, %v1147
        %v1149 = vmul.f32 %v919, %v1148
        %v1150 = vmul.f32 %v923, %v1148
        %v1151 = vadd.f32 %v1143, %v1149
        %v1152 = vadd.f32 %v1144, %v1150
        %v1153 = vlaneseq
        %v1154 = vshrl.u32 %v1153, 7
        %v1155 = vsub.s32 6, %v1154
        %v1156 = vrot.slane %v813, %v1155
        %v1157 = vmul.f32 %v935, %v1156
        %v1158 = vmul.f32 %v939, %v1156
        %v1159 = vadd.f32 %v1151, %v1157
        %v1160 = vadd.f32 %v1152, %v1158
        %v1161 = vlaneseq
        %v1162 = vshrl.u32 %v1161, 7
        %v1163 = vsub.s32 7, %v1162
        %v1164 = vrot.slane %v813, %v1163
        %v1165 = vmul.f32 %v951, %v1164
        %v1166 = vmul.f32 %v955, %v1164
        %v1167 = vadd.f32 %v1159, %v1165
        %v1168 = vadd.f32 %v1160, %v1166
        %v1169 = vlaneseq
        %v1170 = vshrl.u32 %v1169, 7
        %v1171 = vsub.s32 0, %v1170
        %v1172 = vrot.slane %v814, %v1171
        %v1173 = vmul.f32 %v967, %v1172
        %v1174 = vmul.f32 %v971, %v1172
        %v1175 = vadd.f32 %v1167, %v1173
        %v1176 = vadd.f32 %v1168, %v1174
        %v1177 = vlaneseq
        %v1178 = vshrl.u32 %v1177, 7
        %v1179 = vsub.s32 1, %v1178
        %v1180 = vrot.slane %v814, %v1179
        %v1181 = vmul.f32 %v983, %v1180
        %v1182 = vmul.f32 %v987, %v1180
        %v1183 = vadd.f32 %v1175, %v1181
        %v1184 = vadd.f32 %v1176, %v1182
        %v1185 = vlaneseq
        %v1186 = vshrl.u32 %v1185, 7
        %v1187 = vsub.s32 2, %v1186
        %v1188 = vrot.slane %v814, %v1187
        %v1189 = vmul.f32 %v999, %v1188
        %v1190 = vmul.f32 %v1003, %v1188
        %v1191 = vadd.f32 %v1183, %v1189
        %v1192 = vadd.f32 %v1184, %v1190
        %v1193 = vlaneseq
        %v1194 = vshrl.u32 %v1193, 7
        %v1195 = vsub.s32 3, %v1194
        %v1196 = vrot.slane %v814, %v1195
        %v1197 = vmul.f32 %v1015, %v1196
        %v1198 = vmul.f32 %v1019, %v1196
        %v1199 = vadd.f32 %v1191, %v1197
        %v1200 = vadd.f32 %v1192, %v1198
        %v1201 = vlaneseq
        %v1202 = vshrl.u32 %v1201, 7
        %v1203 = vsub.s32 4, %v1202
        %v1204 = vrot.slane %v814, %v1203
        %v1205 = vmul.f32 %v1031, %v1204
        %v1206 = vmul.f32 %v1035, %v1204
        %v1207 = vadd.f32 %v1199, %v1205
        %v1208 = vadd.f32 %v1200, %v1206
        %v1209 = vlaneseq
        %v1210 = vshrl.u32 %v1209, 7
        %v1211 = vsub.s32 5, %v1210
        %v1212 = vrot.slane %v814, %v1211
        %v1213 = vmul.f32 %v1047, %v1212
        %v1214 = vmul.f32 %v1051, %v1212
        %v1215 = vadd.f32 %v1207, %v1213
        %v1216 = vadd.f32 %v1208, %v1214
        %v1217 = vlaneseq
        %v1218 = vshrl.u32 %v1217, 7
        %v1219 = vsub.s32 6, %v1218
        %v1220 = vrot.slane %v814, %v1219
        %v1221 = vmul.f32 %v1063, %v1220
        %v1222 = vmul.f32 %v1067, %v1220
        %v1223 = vadd.f32 %v1215, %v1221
        %v1224 = vadd.f32 %v1216, %v1222
        %v1225 = vlaneseq
        %v1226 = vshrl.u32 %v1225, 7
        %v1227 = vsub.s32 7, %v1226
        %v1228 = vrot.slane %v814, %v1227
        %v1229 = vmul.f32 %v1079, %v1228
        %v1230 = vmul.f32 %v1083, %v1228
        %v1231 = vadd.f32 %v1223, %v1229
        %v1232 = vadd.f32 %v1224, %v1230
        %v1233 = vxor.u32 %v1231, 2147483648
        %v1234 = vxor.u32 %v1232, 2147483648
        %v1235 = vmul.f32 %v1233, 1.442695
        %v1236 = vpow.pop %v1235
        %v1237 = vmul.f32 %v1234, 1.442695
        %v1238 = vpow.pop %v1237
        %v1239 = vadd.f32 %v1236, 1.0
        %v1240 = vadd.f32 %v1238, 1.0
        %v1241 = vrcp.pop %v1239
        %v1242 = vmul.f32 1.0, %v1241
        %v1243 = vrcp.pop %v1240
        %v1244 = vmul.f32 1.0, %v1243
        %v1245 = vlaneseq
        %v1246 = vshrl.u32 %v1245, 7
        %v1247 = vsub.s32 0, %v1246
        %v1248 = vrot.slane %v815, %v1247
        %v1249 = vmul.f32 %v838, %v1248
        %v1250 = vmul.f32 %v843, %v1248
        %v1251 = vadd.f32 %v833, %v1249
        %v1252 = vadd.f32 %v834, %v1250
        %v1253 = vlaneseq
        %v1254 = vshrl.u32 %v1253, 7
        %v1255 = vsub.s32 1, %v1254
        %v1256 = vrot.slane %v815, %v1255
        %v1257 = vmul.f32 %v855, %v1256
        %v1258 = vmul.f32 %v859, %v1256
        %v1259 = vadd.f32 %v1251, %v1257
        %v1260 = vadd.f32 %v1252, %v1258
        %v1261 = vlaneseq
        %v1262 = vshrl.u32 %v1261, 7
        %v1263 = vsub.s32 2, %v1262
        %v1264 = vrot.slane %v815, %v1263
        %v1265 = vmul.f32 %v871, %v1264
        %v1266 = vmul.f32 %v875, %v1264
        %v1267 = vadd.f32 %v1259, %v1265
        %v1268 = vadd.f32 %v1260, %v1266
        %v1269 = vlaneseq
        %v1270 = vshrl.u32 %v1269, 7
        %v1271 = vsub.s32 3, %v1270
        %v1272 = vrot.slane %v815, %v1271
        %v1273 = vmul.f32 %v887, %v1272
        %v1274 = vmul.f32 %v891, %v1272
        %v1275 = vadd.f32 %v1267, %v1273
        %v1276 = vadd.f32 %v1268, %v1274
        %v1277 = vlaneseq
        %v1278 = vshrl.u32 %v1277, 7
        %v1279 = vsub.s32 4, %v1278
        %v1280 = vrot.slane %v815, %v1279
        %v1281 = vmul.f32 %v903, %v1280
        %v1282 = vmul.f32 %v907, %v1280
        %v1283 = vadd.f32 %v1275, %v1281
        %v1284 = vadd.f32 %v1276, %v1282
        %v1285 = vlaneseq
        %v1286 = vshrl.u32 %v1285, 7
        %v1287 = vsub.s32 5, %v1286
        %v1288 = vrot.slane %v815, %v1287
        %v1289 = vmul.f32 %v919, %v1288
        %v1290 = vmul.f32 %v923, %v1288
        %v1291 = vadd.f32 %v1283, %v1289
        %v1292 = vadd.f32 %v1284, %v1290
        %v1293 = vlaneseq
        %v1294 = vshrl.u32 %v1293, 7
        %v1295 = vsub.s32 6, %v1294
        %v1296 = vrot.slane %v815, %v1295
        %v1297 = vmul.f32 %v935, %v1296
        %v1298 = vmul.f32 %v939, %v1296
        %v1299 = vadd.f32 %v1291, %v1297
        %v1300 = vadd.f32 %v1292, %v1298
        %v1301 = vlaneseq
        %v1302 = vshrl.u32 %v1301, 7
        %v1303 = vsub.s32 7, %v1302
        %v1304 = vrot.slane %v815, %v1303
        %v1305 = vmul.f32 %v951, %v1304
        %v1306 = vmul.f32 %v955, %v1304
        %v1307 = vadd.f32 %v1299, %v1305
        %v1308 = vadd.f32 %v1300, %v1306
        %v1309 = vlaneseq
        %v1310 = vshrl.u32 %v1309, 7
        %v1311 = vsub.s32 0, %v1310
        %v1312 = vrot.slane %v816, %v1311
        %v1313 = vmul.f32 %v967, %v1312
        %v1314 = vmul.f32 %v971, %v1312
        %v1315 = vadd.f32 %v1307, %v1313
        %v1316 = vadd.f32 %v1308, %v1314
        %v1317 = vlaneseq
        %v1318 = vshrl.u32 %v1317, 7
        %v1319 = vsub.s32 1, %v1318
        %v1320 = vrot.slane %v816, %v1319
        %v1321 = vmul.f32 %v983, %v1320
        %v1322 = vmul.f32 %v987, %v1320
        %v1323 = vadd.f32 %v1315, %v1321
        %v1324 = vadd.f32 %v1316, %v1322
        %v1325 = vlaneseq
        %v1326 = vshrl.u32 %v1325, 7
        %v1327 = vsub.s32 2, %v1326
        %v1328 = vrot.slane %v816, %v1327
        %v1329 = vmul.f32 %v999, %v1328
        %v1330 = vmul.f32 %v1003, %v1328
        %v1331 = vadd.f32 %v1323, %v1329
        %v1332 = vadd.f32 %v1324, %v1330
        %v1333 = vlaneseq
        %v1334 = vshrl.u32 %v1333, 7
        %v1335 = vsub.s32 3, %v1334
        %v1336 = vrot.slane %v816, %v1335
        %v1337 = vmul.f32 %v1015, %v1336
        %v1338 = vmul.f32 %v1019, %v1336
        %v1339 = vadd.f32 %v1331, %v1337
        %v1340 = vadd.f32 %v1332, %v1338
        %v1341 = vlaneseq
        %v1342 = vshrl.u32 %v1341, 7
        %v1343 = vsub.s32 4, %v1342
        %v1344 = vrot.slane %v816, %v1343
        %v1345 = vmul.f32 %v1031, %v1344
        %v1346 = vmul.f32 %v1035, %v1344
        %v1347 = vadd.f32 %v1339, %v1345
        %v1348 = vadd.f32 %v1340, %v1346
        %v1349 = vlaneseq
        %v1350 = vshrl.u32 %v1349, 7
        %v1351 = vsub.s32 5, %v1350
        %v1352 = vrot.slane %v816, %v1351
        %v1353 = vmul.f32 %v1047, %v1352
        %v1354 = vmul.f32 %v1051, %v1352
        %v1355 = vadd.f32 %v1347, %v1353
        %v1356 = vadd.f32 %v1348, %v1354
        %v1357 = vlaneseq
        %v1358 = vshrl.u32 %v1357, 7
        %v1359 = vsub.s32 6, %v1358
        %v1360 = vrot.slane %v816, %v1359
        %v1361 = vmul.f32 %v1063, %v1360
        %v1362 = vmul.f32 %v1067, %v1360
        %v1363 = vadd.f32 %v1355, %v1361
        %v1364 = vadd.f32 %v1356, %v1362
        %v1365 = vlaneseq
        %v1366 = vshrl.u32 %v1365, 7
        %v1367 = vsub.s32 7, %v1366
        %v1368 = vrot.slane %v816, %v1367
        %v1369 = vmul.f32 %v1079, %v1368
        %v1370 = vmul.f32 %v1083, %v1368
        %v1371 = vadd.f32 %v1363, %v1369
        %v1372 = vadd.f32 %v1364, %v1370
        %v1373 = vxor.u32 %v1371, 2147483648
        %v1374 = vxor.u32 %v1372, 2147483648
        %v1375 = vmul.f32 %v1373, 1.442695
        %v1376 = vpow.pop %v1375
        %v1377 = vmul.f32 %v1374, 1.442695
        %v1378 = vpow.pop %v1377
        %v1379 = vadd.f32 %v1376, 1.0
        %v1380 = vadd.f32 %v1378, 1.0
        %v1381 = vrcp.pop %v1379
        %v1382 = vmul.f32 1.0, %v1381
        %v1383 = vrcp.pop %v1380
        %v1384 = vmul.f32 1.0, %v1383
        %v1385 = vlaneseq
        %v1386 = vshrl.u32 %v1385, 7
        %v1387 = vsub.s32 0, %v1386
        %v1388 = vrot.slane %v817, %v1387
        %v1389 = vmul.f32 %v838, %v1388
        %v1390 = vmul.f32 %v843, %v1388
        %v1391 = vadd.f32 %v833, %v1389
        %v1392 = vadd.f32 %v834, %v1390
        %v1393 = vlaneseq
        %v1394 = vshrl.u32 %v1393, 7
        %v1395 = vsub.s32 1, %v1394
        %v1396 = vrot.slane %v817, %v1395
        %v1397 = vmul.f32 %v855, %v1396
        %v1398 = vmul.f32 %v859, %v1396
        %v1399 = vadd.f32 %v1391, %v1397
        %v1400 = vadd.f32 %v1392, %v1398
        %v1401 = vlaneseq
        %v1402 = vshrl.u32 %v1401, 7
        %v1403 = vsub.s32 2, %v1402
        %v1404 = vrot.slane %v817, %v1403
        %v1405 = vmul.f32 %v871, %v1404
        %v1406 = vmul.f32 %v875, %v1404
        %v1407 = vadd.f32 %v1399, %v1405
        %v1408 = vadd.f32 %v1400, %v1406
        %v1409 = vlaneseq
        %v1410 = vshrl.u32 %v1409, 7
        %v1411 = vsub.s32 3, %v1410
        %v1412 = vrot.slane %v817, %v1411
        %v1413 = vmul.f32 %v887, %v1412
        %v1414 = vmul.f32 %v891, %v1412
        %v1415 = vadd.f32 %v1407, %v1413
        %v1416 = vadd.f32 %v1408, %v1414
        %v1417 = vlaneseq
        %v1418 = vshrl.u32 %v1417, 7
        %v1419 = vsub.s32 4, %v1418
        %v1420 = vrot.slane %v817, %v1419
        %v1421 = vmul.f32 %v903, %v1420
        %v1422 = vmul.f32 %v907, %v1420
        %v1423 = vadd.f32 %v1415, %v1421
        %v1424 = vadd.f32 %v1416, %v1422
        %v1425 = vlaneseq
        %v1426 = vshrl.u32 %v1425, 7
        %v1427 = vsub.s32 5, %v1426
        %v1428 = vrot.slane %v817, %v1427
        %v1429 = vmul.f32 %v919, %v1428
        %v1430 = vmul.f32 %v923, %v1428
        %v1431 = vadd.f32 %v1423, %v1429
        %v1432 = vadd.f32 %v1424, %v1430
        %v1433 = vlaneseq
        %v1434 = vshrl.u32 %v1433, 7
        %v1435 = vsub.s32 6, %v1434
        %v1436 = vrot.slane %v817, %v1435
        %v1437 = vmul.f32 %v935, %v1436
        %v1438 = vmul.f32 %v939, %v1436
        %v1439 = vadd.f32 %v1431, %v1437
        %v1440 = vadd.f32 %v1432, %v1438
        %v1441 = vlaneseq
        %v1442 = vshrl.u32 %v1441, 7
        %v1443 = vsub.s32 7, %v1442
        %v1444 = vrot.slane %v817, %v1443
        %v1445 = vmul.f32 %v951, %v1444
        %v1446 = vmul.f32 %v955, %v1444
        %v1447 = vadd.f32 %v1439, %v1445
        %v1448 = vadd.f32 %v1440, %v1446
        %v1449 = vlaneseq
        %v1450 = vshrl.u32 %v1449, 7
        %v1451 = vsub.s32 0, %v1450
        %v1452 = vrot.slane %v818, %v1451
        %v1453 = vmul.f32 %v967, %v1452
        %v1454 = vmul.f32 %v971, %v1452
        %v1455 = vadd.f32 %v1447, %v1453
        %v1456 = vadd.f32 %v1448, %v1454
        %v1457 = vlaneseq
        %v1458 = vshrl.u32 %v1457, 7
        %v1459 = vsub.s32 1, %v1458
        %v1460 = vrot.slane %v818, %v1459
        %v1461 = vmul.f32 %v983, %v1460
        %v1462 = vmul.f32 %v987, %v1460
        %v1463 = vadd.f32 %v1455, %v1461
        %v1464 = vadd.f32 %v1456, %v1462
        %v1465 = vlaneseq
        %v1466 = vshrl.u32 %v1465, 7
        %v1467 = vsub.s32 2, %v1466
        %v1468 = vrot.slane %v818, %v1467
        %v1469 = vmul.f32 %v999, %v1468
        %v1470 = vmul.f32 %v1003, %v1468
        %v1471 = vadd.f32 %v1463, %v1469
        %v1472 = vadd.f32 %v1464, %v1470
        %v1473 = vlaneseq
        %v1474 = vshrl.u32 %v1473, 7
        %v1475 = vsub.s32 3, %v1474
        %v1476 = vrot.slane %v818, %v1475
        %v1477 = vmul.f32 %v1015, %v1476
        %v1478 = vmul.f32 %v1019, %v1476
        %v1479 = vadd.f32 %v1471, %v1477
        %v1480 = vadd.f32 %v1472, %v1478
        %v1481 = vlaneseq
        %v1482 = vshrl.u32 %v1481, 7
        %v1483 = vsub.s32 4, %v1482
        %v1484 = vrot.slane %v818, %v1483
        %v1485 = vmul.f32 %v1031, %v1484
        %v1486 = vmul.f32 %v1035, %v1484
        %v1487 = vadd.f32 %v1479, %v1485
        %v1488 = vadd.f32 %v1480, %v1486
        %v1489 = vlaneseq
        %v1490 = vshrl.u32 %v1489, 7
        %v1491 = vsub.s32 5, %v1490
        %v1492 = vrot.slane %v818, %v1491
        %v1493 = vmul.f32 %v1047, %v1492
        %v1494 = vmul.f32 %v1051, %v1492
        %v1495 = vadd.f32 %v1487, %v1493
        %v1496 = vadd.f32 %v1488, %v1494
        %v1497 = vlaneseq
        %v1498 = vshrl.u32 %v1497, 7
        %v1499 = vsub.s32 6, %v1498
        %v1500 = vrot.slane %v818, %v1499
        %v1501 = vmul.f32 %v1063, %v1500
        %v1502 = vmul.f32 %v1067, %v1500
        %v1503 = vadd.f32 %v1495, %v1501
        %v1504 = vadd.f32 %v1496, %v1502
        %v1505 = vlaneseq
        %v1506 = vshrl.u32 %v1505, 7
        %v1507 = vsub.s32 7, %v1506
        %v1508 = vrot.slane %v818, %v1507
        %v1509 = vmul.f32 %v1079, %v1508
        %v1510 = vmul.f32 %v1083, %v1508
        %v1511 = vadd.f32 %v1503, %v1509
        %v1512 = vadd.f32 %v1504, %v1510
        %v1513 = vxor.u32 %v1511, 2147483648
        %v1514 = vxor.u32 %v1512, 2147483648
        %v1515 = vmul.f32 %v1513, 1.442695
        %v1516 = vpow.pop %v1515
        %v1517 = vmul.f32 %v1514, 1.442695
        %v1518 = vpow.pop %v1517
        %v1519 = vadd.f32 %v1516, 1.0
        %v1520 = vadd.f32 %v1518, 1.0
        %v1521 = vrcp.pop %v1519
        %v1522 = vmul.f32 1.0, %v1521
        %v1523 = vrcp.pop %v1520
        %v1524 = vmul.f32 1.0, %v1523
        %vm1527 = vcmask 1043456
        %v1528 = vrot.slane %v1242, 4
        %v1529 = vrot.slane %v1244, 4
        %v1530 = vsel %vm1527, %v1528, %v1529
        %v1535 = vrot.slane %v1522, 4
        %v1536 = vrot.slane %v1524, 4
        %v1537 = vsel %vm1527, %v1535, %v1536
        %v1540 = vsel %vm1527, %v1104, %v1528
        %v1541 = vsel %vm1527, %v1384, %v1535
        %vm1542 = vcmask 130048
        %1543 = vst.msk [vmem:[%s365] sm:$0xff] %vm1542, %v1102
        %1544 = vst.msk [vmem:[%s365 + $0x8] sm:$0xff] %vm1542, %v1540
        %1545 = vst.msk [vmem:[%s365 + $0x10] sm:$0xff] %vm1542, %v1530
        %1546 = vst.msk [vmem:[%s365 + $0x18] sm:$0xff] %vm1542, %v1382
        %1547 = vst.msk [vmem:[%s365 + $0x20] sm:$0xff] %vm1542, %v1541
        %1548 = vst.msk [vmem:[%s365 + $0x28] sm:$0xff] %vm1542, %v1537
        %p1549 = scmp.lt.s32.totalorder %s24, 1
        %s1550 = scalar_select %p1549, %s24, 1
        %s1551 = smul.addr %s1550, 6
        %s1552 = smul.addr %s1551, 8
        %s1553 = scalar_lea.vmem %s7, %s1552
        // Predicated region
        $region73: #{_lambda_.1} parent=47 // pred_check
          %p1554 = pneg %p194
        $region74: #{_lambda_.1} parent=47 // pred_check_branch
          %1556 = sbr.rel (%p1554) target = $region76
        $region75: #{_lambda_.1} parent=47 // pred_region
          _
        $region76: #{_lambda_.1} parent=47 // pred_fallthru
          _
      $region48: #{_lambda_.1} parent=5 // pred_fallthru
        _
      %p1557 = scmp.le.s32.totalorder 2, %s19
      // Predicated region
      $region77: #{_lambda_.1} parent=5 // pred_check
        %p1558 = pneg %p1557
      $region78: #{_lambda_.1} parent=5 // pred_check_branch
        %1560 = sbr.rel (%p1558) target = $region80
      $region79: #{_lambda_.1} parent=5 // pred_region
        %s1561 = ssub.s32 %s19, 2
        // Predicated region
        $region81: #{_lambda_.1} parent=79 // pred_check
          %p1562 = pneg %p200
        $region82: #{_lambda_.1} parent=79 // pred_check_branch
          %1564 = sbr.rel (%p1562) target = $region84
        $region83: #{_lambda_.1} parent=79 // pred_region
          %p1565 = scmp.lt.s32.totalorder %s25, 1
          %s1566 = scalar_select %p1565, %s25, 1
          %s1567 = smul.addr %s1566, 6
          %s1568 = smul.addr %s1567, 8
          %s1569 = scalar_lea.vmem %s7, %s1568
        $region84: #{_lambda_.1} parent=79 // pred_fallthru
          _
      $region80: #{_lambda_.1} parent=5 // pred_fallthru
        _
    $region6: #{_lambda_.1} parent=1 // loop_footer
      %s23 = sadd.s32 1, %s19
    $region7: #{_lambda_.1} parent=1 // loop_footer_branch
      %18 = sbr.rel target = $region3
    $region8: #{_lambda_.1} parent=1 // loop_exit
      _
    %1570 = vsyncpa [#allocation3], 1
    %s1571 = scalar_lea.sflag [#allocation3], 1
    %1572 = vsyncpa %s1571, 1
    %1573 = vsyncpa [#allocation5], 1
    %1574 = vsyncpa [#allocation8], 1
    %1575 = vsyncpa [#allocation11], 1

</llo_original>
